<compile_context>
chip_gen: v7x
topology: tpu7x:2x2x1
jax: 0.10.0
libtpu: 0.0.40
codegen_flags: <defaults>
</compile_context>

<pallas_src>
import functools

import jax
import jax.numpy as jnp
from jax.experimental import pallas as pl
from jax.experimental.pallas import tpu as pltpu

LANE = 128  # lane width; output padded to a multiple of this


# ---------------------------------------------------------------------------
# Pallas kernel:
#   masked mean pool (MXU einsum) -> pooler(Linear+tanh) -> dense+ReLU -> out_proj
# One grid step processes TB batch rows; weights stay resident in VMEM.
# ---------------------------------------------------------------------------
def classifier_kernel(emb_ref, len_ref, wp_ref, bp_ref,
                      w1_ref, b1_ref, w2_ref, b2_ref, o_ref):
    TB, S, H = emb_ref.shape

    # Rebuild the (prefix) attention mask in-kernel from per-row lengths.
    lens = len_ref[...]                                           # (TB, 1) int32
    pos = jax.lax.broadcasted_iota(jnp.int32, (TB, 1, S), 2)      # (TB, 1, S)
    mask3 = (pos < lens[:, :, None]).astype(jnp.bfloat16)         # (TB, 1, S) {0,1}

    # Masked sum over the sequence as a batched MXU contraction:
    # no (TB,S,H) f32 temporary; bf16 operands, exact f32 accumulation.
    pooled_sum = jnp.einsum("bqs,bsh->bqh", mask3, emb_ref[...],
                            preferred_element_type=jnp.float32)[:, 0, :]  # (TB, H)

    # Exact integer denominator (clamped to >=1 so padded rows stay finite).
    denom = jnp.maximum(lens, 1).astype(jnp.float32)              # (TB, 1)
    pooled = pooled_sum / denom                                   # (TB, H) f32

    # BERT-style pooler: tanh(Linear(pooled)) -> "pooler_output"
    pooler_out = jnp.tanh(
        jnp.dot(pooled.astype(jnp.bfloat16), wp_ref[...],
                preferred_element_type=jnp.float32) + bp_ref[...])  # (TB, H)

    # x = dropout(pooler_output) (identity at inference); x = relu(dense(x))
    h = jnp.dot(pooler_out.astype(jnp.bfloat16), w1_ref[...],
                preferred_element_type=jnp.float32) + b1_ref[...]
    h = jnp.maximum(h, 0.0)                                        # (TB, D)

    # x = dropout(x) (identity); x = out_proj(x)
    logits = jnp.dot(h.astype(jnp.bfloat16), w2_ref[...],
                     preferred_element_type=jnp.float32) + b2_ref[...]
    o_ref[...] = logits.astype(o_ref.dtype)                        # (TB, LP)


@functools.partial(jax.jit, static_argnames=("batch_tile",))
def fake_news_classifier_forward(input_ids, attention_mask, params, *, batch_tile=32):
    """input_ids: (B, S) int32, attention_mask: (B, S) right-padding mask.

    params holds bf16 weights shaped (in_features, out_features), f32 biases,
    and the bf16 embedding table.  Returns logits (B, num_labels) f32.
    """
    B, S = input_ids.shape
    H = params["w_pool"].shape[0]
    D = params["w_dense"].shape[1]
    L = params["w_out"].shape[1]

    # --- frozen-encoder surrogate glue (see TODOs at top of file) -----------
    emb = params["embedding"][input_ids]                                  # (B,S,H) bf16
    lengths = jnp.sum(attention_mask, axis=1, keepdims=True).astype(jnp.int32)  # (B,1)

    # Lane-dense output: pad num_labels -> multiple of 128 (sliced off below).
    LP = max(LANE, pl.cdiv(L, LANE) * LANE)
    w_out_p = jnp.zeros((D, LP), jnp.bfloat16).at[:, :L].set(params["w_out"])
    b_out_p = jnp.zeros((1, LP), jnp.float32).at[:, :L].set(params["b_out"])

    # Pad batch up to a multiple of the batch tile (padded rows have length 0).
    TB = batch_tile
    Bp = pl.cdiv(B, TB) * TB
    if Bp != B:
        emb = jnp.pad(emb, ((0, Bp - B), (0, 0), (0, 0)))
        lengths = jnp.pad(lengths, ((0, Bp - B), (0, 0)))

    # Keep the grid >= 2 steps where possible so the "parallel" batch axis can
    # split across both TensorCores on v7x.
    grid = (Bp // TB,)

    resident = lambda shape: pl.BlockSpec(shape, lambda i: (0,) * len(shape))

    cost = pl.CostEstimate(
        flops=2 * Bp * (S * H + H * H + H * D + D * LP),
        transcendentals=Bp * H,
        bytes_accessed=(Bp * S * H * 2 + Bp * 4
                        + (H * H + H * D + D * LP) * 2
                        + (H + D + LP) * 4
                        + Bp * LP * 4),
    )

    out = pl.pallas_call(
        classifier_kernel,
        out_shape=jax.ShapeDtypeStruct((Bp, LP), jnp.float32),
        grid=grid,
        in_specs=[
            pl.BlockSpec((TB, S, H), lambda i: (i, 0, 0)),   # emb     (pipelined)
            pl.BlockSpec((TB, 1), lambda i: (i, 0)),         # lengths (pipelined)
            resident((H, H)),                                # w_pool  (resident)
            resident((1, H)),                                # b_pool
            resident((H, D)),                                # w_dense
            resident((1, D)),                                # b_dense
            resident((D, LP)),                               # w_out (lane-padded)
            resident((1, LP)),                               # b_out (lane-padded)
        ],
        out_specs=pl.BlockSpec((TB, LP), lambda i: (i, 0)),
        compiler_params=pltpu.CompilerParams(
            dimension_semantics=("parallel",),
            # Explicit scoped-VMEM limit; raise toward 64-96 MiB on v5e/v6e for
            # PhoBERT-scale batch tiles, keep <= ~56 MiB on v7x (64 MiB physical).
            vmem_limit_bytes=48 * 1024 * 1024,
        ),
        cost_estimate=cost,
    )(emb, lengths,
      params["w_pool"], params["b_pool"],
      params["w_dense"], params["b_dense"],
      w_out_p, b_out_p)

    return out[:B, :L]


# ---------------------------------------------------------------------------
# Pure-JAX reference (mirrors the kernel's bf16 casts; exact division).
# ---------------------------------------------------------------------------
def reference_forward(input_ids, attention_mask, params):
    emb = params["embedding"][input_ids].astype(jnp.float32)
    mask = attention_mask.astype(jnp.float32)
    denom = jnp.maximum(jnp.sum(mask, axis=1, keepdims=True), 1.0)
    pooled = jnp.sum(emb * mask[:, :, None], axis=1) / denom
    pooler_out = jnp.tanh(
        jnp.dot(pooled.astype(jnp.bfloat16), params["w_pool"],
                preferred_element_type=jnp.float32) + params["b_pool"])
    h = jnp.maximum(
        jnp.dot(pooler_out.astype(jnp.bfloat16), params["w_dense"],
                preferred_element_type=jnp.float32) + params["b_dense"], 0.0)
    return (jnp.dot(h.astype(jnp.bfloat16), params["w_out"],
                    preferred_element_type=jnp.float32) + params["b_out"])


if __name__ == "__main__":
    # small, shape-consistent config (2 grid steps at TB=32)
    B, S = 48, 16         # batch, sequence length
    VOCAB = 64
    HIDDEN = 128          # hidden_size (PhoBERT hidden dim)
    DENSE = 128           # dense_size
    NUM_LABELS = 4        # num_labels

    key = jax.random.PRNGKey(0)
    (k_emb, k_ids, k_len, k_wp, k_bp, k_w1, k_b1, k_w2, k_b2) = jax.random.split(key, 9)

    # deterministic "parameters" (embedding + weights bf16, biases f32)
    params = {
        "embedding": (jax.random.normal(k_emb, (VOCAB, HIDDEN), jnp.float32) * 0.02
                      ).astype(jnp.bfloat16),
        "w_pool":  (jax.random.normal(k_wp, (HIDDEN, HIDDEN), jnp.float32) * 0.02
                    ).astype(jnp.bfloat16),
        "b_pool":  jax.random.normal(k_bp, (1, HIDDEN), jnp.float32) * 0.01,
        "w_dense": (jax.random.normal(k_w1, (HIDDEN, DENSE), jnp.float32) * 0.02
                    ).astype(jnp.bfloat16),
        "b_dense": jax.random.normal(k_b1, (1, DENSE), jnp.float32) * 0.01,
        "w_out":   (jax.random.normal(k_w2, (DENSE, NUM_LABELS), jnp.float32) * 0.02
                    ).astype(jnp.bfloat16),
        "b_out":   jax.random.normal(k_b2, (1, NUM_LABELS), jnp.float32) * 0.01,
    }

    # deterministic inputs: input_ids + right-padded attention_mask
    input_ids = jax.random.randint(k_ids, (B, S), 0, VOCAB, dtype=jnp.int32)
    lengths = jax.random.randint(k_len, (B,), S // 2, S + 1, dtype=jnp.int32)
    attention_mask = (jnp.arange(S)[None, :] < lengths[:, None]).astype(jnp.float32)

    logits = fake_news_classifier_forward(input_ids, attention_mask, params,
                                          batch_tile=32)
    logits = jax.block_until_ready(logits)

    ref = reference_forward(input_ids, attention_mask, params)
    assert logits.shape == (B, NUM_LABELS)
    assert jnp.allclose(logits, ref, atol=1e-3, rtol=1e-2), "mismatch vs reference"

    print("KERNEL_OK")
</pallas_src>

<mosaic_0001>
module attributes {stable_mosaic.version = 11 : i64} {
  func.func @classifier_kernel(%arg0: i32, %arg1: memref<32x16x128xbf16, #tpu.memory_space<vmem>>, %arg2: memref<32x1xi32, #tpu.memory_space<vmem>>, %arg3: memref<128x128xbf16, #tpu.memory_space<vmem>>, %arg4: memref<1x128xf32, #tpu.memory_space<vmem>>, %arg5: memref<128x128xbf16, #tpu.memory_space<vmem>>, %arg6: memref<1x128xf32, #tpu.memory_space<vmem>>, %arg7: memref<128x128xbf16, #tpu.memory_space<vmem>>, %arg8: memref<1x128xf32, #tpu.memory_space<vmem>>, %arg9: memref<32x128xf32, #tpu.memory_space<vmem>>) attributes {dimension_semantics = [#tpu.dimension_semantics<parallel>], iteration_bounds = array<i64: 2>, scalar_prefetch = 0 : i64, scratch_operands = 0 : i64, tpu.core_type = #tpu.core_type<tc>, window_params = [{transform_indices = @transform_0, window_bounds = array<i64: 32, 16, 128>}, {transform_indices = @transform_1, window_bounds = array<i64: 32, 1>}, {pipeline_mode = #tpu.pipeline_mode<synchronous>, transform_indices = @transform_2, window_bounds = array<i64: 128, 128>}, {pipeline_mode = #tpu.pipeline_mode<synchronous>, transform_indices = @transform_3, window_bounds = array<i64: 1, 128>}, {pipeline_mode = #tpu.pipeline_mode<synchronous>, transform_indices = @transform_4, window_bounds = array<i64: 128, 128>}, {pipeline_mode = #tpu.pipeline_mode<synchronous>, transform_indices = @transform_5, window_bounds = array<i64: 1, 128>}, {pipeline_mode = #tpu.pipeline_mode<synchronous>, transform_indices = @transform_6, window_bounds = array<i64: 128, 128>}, {pipeline_mode = #tpu.pipeline_mode<synchronous>, transform_indices = @transform_7, window_bounds = array<i64: 1, 128>}, {transform_indices = @transform_8, window_bounds = array<i64: 32, 128>}]} {
    %c0 = arith.constant 0 : index
    %c0_0 = arith.constant 0 : index
    %0 = vector.load %arg2[%c0, %c0_0] : memref<32x1xi32, #tpu.memory_space<vmem>>, vector<32x1xi32>
    %1 = tpu.iota {dimensions = array<i32: 2>} : vector<32x1x16xi32>
    %2 = vector.shape_cast %0 : vector<32x1xi32> to vector<32x1x1xi32>
    %3 = vector.broadcast %2 : vector<32x1x1xi32> to vector<32x1x16xi32>
    %4 = arith.cmpi slt, %1, %3 : vector<32x1x16xi32>
    %5 = arith.extui %4 : vector<32x1x16xi1> to vector<32x1x16xi32>
    %6 = arith.sitofp %5 : vector<32x1x16xi32> to vector<32x1x16xf32>
    %7 = arith.truncf %6 : vector<32x1x16xf32> to vector<32x1x16xbf16>
    %c0_1 = arith.constant 0 : index
    %c0_2 = arith.constant 0 : index
    %c0_3 = arith.constant 0 : index
    %8 = vector.load %arg1[%c0_1, %c0_2, %c0_3] : memref<32x16x128xbf16, #tpu.memory_space<vmem>>, vector<32x16x128xbf16>
    "tpu.trace_start"() <{level = 10 : i32, message = "bqs,bsh->bqh"}> : () -> ()
    %cst = arith.constant dense<0.000000e+00> : vector<32x1x128xf32>
    %9 = tpu.matmul %7, %8, %cst {dimension_numbers = #tpu.dot_dimension_numbers<[2], [1], [1], [2], [0, 0, 0, 1, 1, 2], [0], [0]>} : vector<32x1x16xbf16>, vector<32x16x128xbf16>, vector<32x1x128xf32> -> vector<32x1x128xf32>
    "tpu.trace_stop"() : () -> ()
    %10 = vector.shape_cast %9 : vector<32x1x128xf32> to vector<32x128xf32>
    %c1_i32 = arith.constant 1 : i32
    %11 = vector.broadcast %c1_i32 : i32 to vector<32x1xi32>
    %12 = arith.maxsi %0, %11 : vector<32x1xi32>
    %13 = arith.sitofp %12 : vector<32x1xi32> to vector<32x1xf32>
    %14 = vector.broadcast %13 : vector<32x1xf32> to vector<32x128xf32>
    %15 = arith.divf %10, %14 : vector<32x128xf32>
    %16 = arith.truncf %15 : vector<32x128xf32> to vector<32x128xbf16>
    %c0_4 = arith.constant 0 : index
    %c0_5 = arith.constant 0 : index
    %17 = vector.load %arg3[%c0_4, %c0_5] : memref<128x128xbf16, #tpu.memory_space<vmem>>, vector<128x128xbf16>
    %cst_6 = arith.constant dense<0.000000e+00> : vector<32x128xf32>
    %18 = tpu.matmul %16, %17, %cst_6 {dimension_numbers = #tpu.dot_dimension_numbers<[1], [0], [0], [1], [0, 0, 1, 1], [], []>} : vector<32x128xbf16>, vector<128x128xbf16>, vector<32x128xf32> -> vector<32x128xf32>
    %c0_7 = arith.constant 0 : index
    %c0_8 = arith.constant 0 : index
    %19 = vector.load %arg4[%c0_7, %c0_8] : memref<1x128xf32, #tpu.memory_space<vmem>>, vector<1x128xf32>
    %20 = vector.broadcast %19 : vector<1x128xf32> to vector<32x128xf32>
    %21 = arith.addf %18, %20 : vector<32x128xf32>
    %22 = math.tanh %21 : vector<32x128xf32>
    %23 = arith.truncf %22 : vector<32x128xf32> to vector<32x128xbf16>
    %c0_9 = arith.constant 0 : index
    %c0_10 = arith.constant 0 : index
    %24 = vector.load %arg5[%c0_9, %c0_10] : memref<128x128xbf16, #tpu.memory_space<vmem>>, vector<128x128xbf16>
    %cst_11 = arith.constant dense<0.000000e+00> : vector<32x128xf32>
    %25 = tpu.matmul %23, %24, %cst_11 {dimension_numbers = #tpu.dot_dimension_numbers<[1], [0], [0], [1], [0, 0, 1, 1], [], []>} : vector<32x128xbf16>, vector<128x128xbf16>, vector<32x128xf32> -> vector<32x128xf32>
    %c0_12 = arith.constant 0 : index
    %c0_13 = arith.constant 0 : index
    %26 = vector.load %arg6[%c0_12, %c0_13] : memref<1x128xf32, #tpu.memory_space<vmem>>, vector<1x128xf32>
    %27 = vector.broadcast %26 : vector<1x128xf32> to vector<32x128xf32>
    %28 = arith.addf %25, %27 : vector<32x128xf32>
    %cst_14 = arith.constant 0.000000e+00 : f32
    %29 = vector.broadcast %cst_14 : f32 to vector<32x128xf32>
    %30 = arith.maximumf %28, %29 : vector<32x128xf32>
    %31 = arith.truncf %30 : vector<32x128xf32> to vector<32x128xbf16>
    %c0_15 = arith.constant 0 : index
    %c0_16 = arith.constant 0 : index
    %32 = vector.load %arg7[%c0_15, %c0_16] : memref<128x128xbf16, #tpu.memory_space<vmem>>, vector<128x128xbf16>
    %cst_17 = arith.constant dense<0.000000e+00> : vector<32x128xf32>
    %33 = tpu.matmul %31, %32, %cst_17 {dimension_numbers = #tpu.dot_dimension_numbers<[1], [0], [0], [1], [0, 0, 1, 1], [], []>} : vector<32x128xbf16>, vector<128x128xbf16>, vector<32x128xf32> -> vector<32x128xf32>
    %c0_18 = arith.constant 0 : index
    %c0_19 = arith.constant 0 : index
    %34 = vector.load %arg8[%c0_18, %c0_19] : memref<1x128xf32, #tpu.memory_space<vmem>>, vector<1x128xf32>
    %35 = vector.broadcast %34 : vector<1x128xf32> to vector<32x128xf32>
    %36 = arith.addf %33, %35 : vector<32x128xf32>
    %c0_20 = arith.constant 0 : index
    %c0_21 = arith.constant 0 : index
    %37 = vector.load %arg9[%c0_20, %c0_21] : memref<32x128xf32, #tpu.memory_space<vmem>>, vector<32x128xf32>
    tpu.vector_store %arg9[%c0_20, %c0_21], %36 {strides = array<i32>} : memref<32x128xf32, #tpu.memory_space<vmem>>, vector<32x128xf32>,
    return
  }
  func.func @transform_0(%arg0: i32) -> (i32, i32, i32) {
    %c0_i32 = arith.constant 0 : i32
    %c0_i32_0 = arith.constant 0 : i32
    %c0_i32_1 = arith.constant 0 : i32
    return %arg0, %c0_i32, %c0_i32_0 : i32, i32, i32
  }
  func.func @transform_1(%arg0: i32) -> (i32, i32) {
    %c0_i32 = arith.constant 0 : i32
    %c0_i32_0 = arith.constant 0 : i32
    return %arg0, %c0_i32 : i32, i32
  }
  func.func @transform_2(%arg0: i32) -> (i32, i32) {
    %c0_i32 = arith.constant 0 : i32
    %c0_i32_0 = arith.constant 0 : i32
    %c0_i32_1 = arith.constant 0 : i32
    return %c0_i32, %c0_i32_0 : i32, i32
  }
  func.func @transform_3(%arg0: i32) -> (i32, i32) {
    %c0_i32 = arith.constant 0 : i32
    %c0_i32_0 = arith.constant 0 : i32
    %c0_i32_1 = arith.constant 0 : i32
    return %c0_i32, %c0_i32_0 : i32, i32
  }
  func.func @transform_4(%arg0: i32) -> (i32, i32) {
    %c0_i32 = arith.constant 0 : i32
    %c0_i32_0 = arith.constant 0 : i32
    %c0_i32_1 = arith.constant 0 : i32
    return %c0_i32, %c0_i32_0 : i32, i32
  }
  func.func @transform_5(%arg0: i32) -> (i32, i32) {
    %c0_i32 = arith.constant 0 : i32
    %c0_i32_0 = arith.constant 0 : i32
    %c0_i32_1 = arith.constant 0 : i32
    return %c0_i32, %c0_i32_0 : i32, i32
  }
  func.func @transform_6(%arg0: i32) -> (i32, i32) {
    %c0_i32 = arith.constant 0 : i32
    %c0_i32_0 = arith.constant 0 : i32
    %c0_i32_1 = arith.constant 0 : i32
    return %c0_i32, %c0_i32_0 : i32, i32
  }
  func.func @transform_7(%arg0: i32) -> (i32, i32) {
    %c0_i32 = arith.constant 0 : i32
    %c0_i32_0 = arith.constant 0 : i32
    %c0_i32_1 = arith.constant 0 : i32
    return %c0_i32, %c0_i32_0 : i32, i32
  }
  func.func @transform_8(%arg0: i32) -> (i32, i32) {
    %c0_i32 = arith.constant 0 : i32
    %c0_i32_0 = arith.constant 0 : i32
    return %arg0, %c0_i32 : i32, i32
  }
}

</mosaic_0001>

<llo_original>
// kernel: fake_news_classifier_forward.1
$region0: #{fake_news_classifier_forward.1}
  #allocation0 [shape = 'u32[]', space=smem, size = 0x4, offset = 0x4, fixed_abs, tag = 'smem constant byte address 0x4 - core index']
  #allocation1 [shape = 'u32[144,128]{1,0:T(1,128)}', space=vmem, size = 0x12000, scoped, tag = 'internal scratch']
  %s0 = inlined_call_operand.vmem [shape: bf16[64,16,128], index: 0, kind: input, shape index: {}]
  %s1 = inlined_call_operand.vmem [shape: s32[64,1], index: 1, kind: input, shape index: {}]
  %s2 = inlined_call_operand.vmem [shape: bf16[128,128], index: 2, kind: input, shape index: {}]
  %s3 = inlined_call_operand.vmem [shape: f32[1,128], index: 3, kind: input, shape index: {}]
  %s4 = inlined_call_operand.vmem [shape: bf16[128,128], index: 4, kind: input, shape index: {}]
  %s5 = inlined_call_operand.vmem [shape: f32[1,128], index: 5, kind: input, shape index: {}]
  %s6 = inlined_call_operand.vmem [shape: bf16[128,128], index: 6, kind: input, shape index: {}]
  %s7 = inlined_call_operand.vmem [shape: f32[1,128], index: 7, kind: input, shape index: {}]
  %s8 = inlined_call_operand.vmem [shape: f32[64,128], index: 8, kind: output, shape index: {}]
  %s9 = sld [smem:[#allocation0]]
  $region65: #{fake_news_classifier_forward.1} parent=0
    _
  %s11 = ssub.s32 1, %s9
  %s12 = scalar_select 0, %s11, %s9
  loop: start=0, step=1, limit=4
  $region2: #{fake_news_classifier_forward.1} parent=0 // loop_pre_header
    _
  $region3: #{fake_news_classifier_forward.1} parent=0 // loop_header
    %s14 = sphi 0, %s18
    %p15 = scmp.ge.s32.totalorder %s14, 4
    %s24 = sphi 0, %s26
    %s27 = sphi 0, %s24
    %s28 = sphi 0, %s27
    %s44 = sphi 0, %s28
    %s50 = sphi 0, %s52
    %s53 = sphi 0, %s50
    %s54 = sphi 0, %s53
    %s70 = sphi 0, %s54
    %s74 = sphi 0, %s74
    %s76 = sphi 0, %s74
    %s77 = sphi 0, %s76
    %s91 = sphi 0, %s77
    %s95 = sphi 0, %s95
    %s97 = sphi 0, %s95
    %s98 = sphi 0, %s97
    %s112 = sphi 0, %s98
    %s116 = sphi 0, %s116
    %s118 = sphi 0, %s116
    %s119 = sphi 0, %s118
    %s133 = sphi 0, %s119
    %s137 = sphi 0, %s137
    %s139 = sphi 0, %s137
    %s140 = sphi 0, %s139
    %s154 = sphi 0, %s140
    %s158 = sphi 0, %s158
    %s160 = sphi 0, %s158
    %s161 = sphi 0, %s160
    %s175 = sphi 0, %s161
    %s179 = sphi 0, %s179
    %s181 = sphi 0, %s179
    %s182 = sphi 0, %s181
    %s196 = sphi 0, %s182
    %s202 = sphi 0, %s204
    %s205 = sphi 0, %s202
    %s206 = sphi 0, %s205
    %s222 = sphi 0, %s206
  $region4: #{fake_news_classifier_forward.1} parent=0 // loop_header_branch
    %17 = sbr.rel (%p15) target = $region8
  $region5: #{fake_news_classifier_forward.1} parent=0 // loop_body
    %s19 = ssub.s32 %s14, 1
    %s20 = ssub.s32 %s14, 2
    %s21 = sadd.s32 %s14, 1
    %s22 = ssub.s32 %s14, %s21
    %p23 = scmp.eq.s32.totalorder %s22, 0
    %s25 = sadd.s32 %s24, 1
    %s26 = scalar_select %p23, %s24, %s25
    %p29 = pneg %p23
    %p30 = scmp.eq.s32.totalorder %s14, 1
    %p31 = por %p29, %p30
    %p32 = scmp.ne.s32.totalorder %s24, %s27
    %p33 = scmp.eq.s32.totalorder %s14, 0
    %p34 = por %p32, %p33
    %p35 = scmp.ne.s32.totalorder %s24, %s27
    %p36 = scmp.eq.s32.totalorder %s19, 1
    %p37 = por %p35, %p36
    %p38 = scmp.ne.s32.totalorder %s27, %s28
    %p39 = scmp.eq.s32.totalorder %s19, 0
    %p40 = por %p38, %p39
    %p41 = scmp.ne.s32.totalorder %s27, %s28
    %p42 = scmp.eq.s32.totalorder %s20, 1
    %p43 = por %p41, %p42
    %p45 = scmp.ne.s32.totalorder %s28, %s44
    %p46 = scmp.eq.s32.totalorder %s20, 0
    %p47 = por %p45, %p46
    %s48 = ssub.s32 %s14, %s21
    %p49 = scmp.eq.s32.totalorder %s48, 0
    %s51 = sadd.s32 %s50, 1
    %s52 = scalar_select %p49, %s50, %s51
    %p55 = pneg %p49
    %p56 = scmp.eq.s32.totalorder %s14, 1
    %p57 = por %p55, %p56
    %p58 = scmp.ne.s32.totalorder %s50, %s53
    %p59 = scmp.eq.s32.totalorder %s14, 0
    %p60 = por %p58, %p59
    %p61 = scmp.ne.s32.totalorder %s50, %s53
    %p62 = scmp.eq.s32.totalorder %s19, 1
    %p63 = por %p61, %p62
    %p64 = scmp.ne.s32.totalorder %s53, %s54
    %p65 = scmp.eq.s32.totalorder %s19, 0
    %p66 = por %p64, %p65
    %p67 = scmp.ne.s32.totalorder %s53, %s54
    %p68 = scmp.eq.s32.totalorder %s20, 1
    %p69 = por %p67, %p68
    %p71 = scmp.ne.s32.totalorder %s54, %s70
    %p72 = scmp.eq.s32.totalorder %s20, 0
    %p73 = por %p71, %p72
    %s75 = sadd.s32 %s74, 1
    %p78 = scmp.eq.s32.totalorder %s14, 1
    %p79 = scmp.ne.s32.totalorder %s74, %s76
    %p80 = scmp.eq.s32.totalorder %s14, 0
    %p81 = por %p79, %p80
    %p82 = scmp.ne.s32.totalorder %s74, %s76
    %p83 = scmp.eq.s32.totalorder %s19, 1
    %p84 = por %p82, %p83
    %p85 = scmp.ne.s32.totalorder %s76, %s77
    %p86 = scmp.eq.s32.totalorder %s19, 0
    %p87 = por %p85, %p86
    %p88 = scmp.ne.s32.totalorder %s76, %s77
    %p89 = scmp.eq.s32.totalorder %s20, 1
    %p90 = por %p88, %p89
    %p92 = scmp.ne.s32.totalorder %s77, %s91
    %p93 = scmp.eq.s32.totalorder %s20, 0
    %p94 = por %p92, %p93
    %s96 = sadd.s32 %s95, 1
    %p99 = scmp.eq.s32.totalorder %s14, 1
    %p100 = scmp.ne.s32.totalorder %s95, %s97
    %p101 = scmp.eq.s32.totalorder %s14, 0
    %p102 = por %p100, %p101
    %p103 = scmp.ne.s32.totalorder %s95, %s97
    %p104 = scmp.eq.s32.totalorder %s19, 1
    %p105 = por %p103, %p104
    %p106 = scmp.ne.s32.totalorder %s97, %s98
    %p107 = scmp.eq.s32.totalorder %s19, 0
    %p108 = por %p106, %p107
    %p109 = scmp.ne.s32.totalorder %s97, %s98
    %p110 = scmp.eq.s32.totalorder %s20, 1
    %p111 = por %p109, %p110
    %p113 = scmp.ne.s32.totalorder %s98, %s112
    %p114 = scmp.eq.s32.totalorder %s20, 0
    %p115 = por %p113, %p114
    %s117 = sadd.s32 %s116, 1
    %p120 = scmp.eq.s32.totalorder %s14, 1
    %p121 = scmp.ne.s32.totalorder %s116, %s118
    %p122 = scmp.eq.s32.totalorder %s14, 0
    %p123 = por %p121, %p122
    %p124 = scmp.ne.s32.totalorder %s116, %s118
    %p125 = scmp.eq.s32.totalorder %s19, 1
    %p126 = por %p124, %p125
    %p127 = scmp.ne.s32.totalorder %s118, %s119
    %p128 = scmp.eq.s32.totalorder %s19, 0
    %p129 = por %p127, %p128
    %p130 = scmp.ne.s32.totalorder %s118, %s119
    %p131 = scmp.eq.s32.totalorder %s20, 1
    %p132 = por %p130, %p131
    %p134 = scmp.ne.s32.totalorder %s119, %s133
    %p135 = scmp.eq.s32.totalorder %s20, 0
    %p136 = por %p134, %p135
    %s138 = sadd.s32 %s137, 1
    %p141 = scmp.eq.s32.totalorder %s14, 1
    %p142 = scmp.ne.s32.totalorder %s137, %s139
    %p143 = scmp.eq.s32.totalorder %s14, 0
    %p144 = por %p142, %p143
    %p145 = scmp.ne.s32.totalorder %s137, %s139
    %p146 = scmp.eq.s32.totalorder %s19, 1
    %p147 = por %p145, %p146
    %p148 = scmp.ne.s32.totalorder %s139, %s140
    %p149 = scmp.eq.s32.totalorder %s19, 0
    %p150 = por %p148, %p149
    %p151 = scmp.ne.s32.totalorder %s139, %s140
    %p152 = scmp.eq.s32.totalorder %s20, 1
    %p153 = por %p151, %p152
    %p155 = scmp.ne.s32.totalorder %s140, %s154
    %p156 = scmp.eq.s32.totalorder %s20, 0
    %p157 = por %p155, %p156
    %s159 = sadd.s32 %s158, 1
    %p162 = scmp.eq.s32.totalorder %s14, 1
    %p163 = scmp.ne.s32.totalorder %s158, %s160
    %p164 = scmp.eq.s32.totalorder %s14, 0
    %p165 = por %p163, %p164
    %p166 = scmp.ne.s32.totalorder %s158, %s160
    %p167 = scmp.eq.s32.totalorder %s19, 1
    %p168 = por %p166, %p167
    %p169 = scmp.ne.s32.totalorder %s160, %s161
    %p170 = scmp.eq.s32.totalorder %s19, 0
    %p171 = por %p169, %p170
    %p172 = scmp.ne.s32.totalorder %s160, %s161
    %p173 = scmp.eq.s32.totalorder %s20, 1
    %p174 = por %p172, %p173
    %p176 = scmp.ne.s32.totalorder %s161, %s175
    %p177 = scmp.eq.s32.totalorder %s20, 0
    %p178 = por %p176, %p177
    %s180 = sadd.s32 %s179, 1
    %p183 = scmp.eq.s32.totalorder %s14, 1
    %p184 = scmp.ne.s32.totalorder %s179, %s181
    %p185 = scmp.eq.s32.totalorder %s14, 0
    %p186 = por %p184, %p185
    %p187 = scmp.ne.s32.totalorder %s179, %s181
    %p188 = scmp.eq.s32.totalorder %s19, 1
    %p189 = por %p187, %p188
    %p190 = scmp.ne.s32.totalorder %s181, %s182
    %p191 = scmp.eq.s32.totalorder %s19, 0
    %p192 = por %p190, %p191
    %p193 = scmp.ne.s32.totalorder %s181, %s182
    %p194 = scmp.eq.s32.totalorder %s20, 1
    %p195 = por %p193, %p194
    %p197 = scmp.ne.s32.totalorder %s182, %s196
    %p198 = scmp.eq.s32.totalorder %s20, 0
    %p199 = por %p197, %p198
    %s200 = ssub.s32 %s14, %s21
    %p201 = scmp.eq.s32.totalorder %s200, 0
    %s203 = sadd.s32 %s202, 1
    %s204 = scalar_select %p201, %s202, %s203
    %p207 = pneg %p201
    %p208 = scmp.eq.s32.totalorder %s14, 1
    %p209 = por %p207, %p208
    %p210 = scmp.ne.s32.totalorder %s202, %s205
    %p211 = scmp.eq.s32.totalorder %s14, 0
    %p212 = por %p210, %p211
    %p213 = scmp.ne.s32.totalorder %s202, %s205
    %p214 = scmp.eq.s32.totalorder %s19, 1
    %p215 = por %p213, %p214
    %p216 = scmp.ne.s32.totalorder %s205, %s206
    %p217 = scmp.eq.s32.totalorder %s19, 0
    %p218 = por %p216, %p217
    %p219 = scmp.ne.s32.totalorder %s205, %s206
    %p220 = scmp.eq.s32.totalorder %s20, 1
    %p221 = por %p219, %p220
    %p223 = scmp.ne.s32.totalorder %s206, %s222
    %p224 = scmp.eq.s32.totalorder %s20, 0
    %p225 = por %p223, %p224
    %p226 = scmp.le.s32.totalorder 1, %s14
    %p227 = scmp.lt.s32.totalorder %s14, 3
    %p228 = pnand %p226, %p227
    %p229 = pneg %p228
    // Predicated region
    $region9: #{fake_news_classifier_forward.1} parent=5 // pred_check
      _
    $region10: #{fake_news_classifier_forward.1} parent=5 // pred_check_branch
      %231 = sbr.rel (%p228) target = $region12
    $region11: #{fake_news_classifier_forward.1} parent=5 // pred_region
      %s232 = ssub.s32 %s14, 1
      // Predicated region
      $region13: #{fake_news_classifier_forward.1} parent=11 // pred_check
        %p233 = pneg %p87
      $region14: #{fake_news_classifier_forward.1} parent=11 // pred_check_branch
        %235 = sbr.rel (%p233) target = $region16
      $region15: #{fake_news_classifier_forward.1} parent=11 // pred_region
        _
      $region16: #{fake_news_classifier_forward.1} parent=11 // pred_fallthru
        _
      // Predicated region
      $region17: #{fake_news_classifier_forward.1} parent=11 // pred_check
        %p236 = pneg %p108
      $region18: #{fake_news_classifier_forward.1} parent=11 // pred_check_branch
        %238 = sbr.rel (%p236) target = $region20
      $region19: #{fake_news_classifier_forward.1} parent=11 // pred_region
        _
      $region20: #{fake_news_classifier_forward.1} parent=11 // pred_fallthru
        _
      // Predicated region
      $region21: #{fake_news_classifier_forward.1} parent=11 // pred_check
        %p239 = pneg %p129
      $region22: #{fake_news_classifier_forward.1} parent=11 // pred_check_branch
        %241 = sbr.rel (%p239) target = $region24
      $region23: #{fake_news_classifier_forward.1} parent=11 // pred_region
        _
      $region24: #{fake_news_classifier_forward.1} parent=11 // pred_fallthru
        _
      // Predicated region
      $region25: #{fake_news_classifier_forward.1} parent=11 // pred_check
        %p242 = pneg %p150
      $region26: #{fake_news_classifier_forward.1} parent=11 // pred_check_branch
        %244 = sbr.rel (%p242) target = $region28
      $region27: #{fake_news_classifier_forward.1} parent=11 // pred_region
        _
      $region28: #{fake_news_classifier_forward.1} parent=11 // pred_fallthru
        _
      // Predicated region
      $region29: #{fake_news_classifier_forward.1} parent=11 // pred_check
        %p245 = pneg %p171
      $region30: #{fake_news_classifier_forward.1} parent=11 // pred_check_branch
        %247 = sbr.rel (%p245) target = $region32
      $region31: #{fake_news_classifier_forward.1} parent=11 // pred_region
        _
      $region32: #{fake_news_classifier_forward.1} parent=11 // pred_fallthru
        _
      // Predicated region
      $region33: #{fake_news_classifier_forward.1} parent=11 // pred_check
        %p248 = pneg %p192
      $region34: #{fake_news_classifier_forward.1} parent=11 // pred_check_branch
        %250 = sbr.rel (%p248) target = $region36
      $region35: #{fake_news_classifier_forward.1} parent=11 // pred_region
        _
      $region36: #{fake_news_classifier_forward.1} parent=11 // pred_fallthru
        _
    $region12: #{fake_news_classifier_forward.1} parent=5 // pred_fallthru
      _
    %p251 = scmp.lt.s32.totalorder %s14, 2
    // Predicated region
    $region37: #{fake_news_classifier_forward.1} parent=5 // pred_check
      %p252 = pneg %p251
    $region38: #{fake_news_classifier_forward.1} parent=5 // pred_check_branch
      %254 = sbr.rel (%p252) target = $region40
    $region39: #{fake_news_classifier_forward.1} parent=5 // pred_region
      // Predicated region
      $region41: #{fake_news_classifier_forward.1} parent=39 // pred_check
        %p255 = pneg %p34
      $region42: #{fake_news_classifier_forward.1} parent=39 // pred_check_branch
        %257 = sbr.rel (%p255) target = $region44
      $region43: #{fake_news_classifier_forward.1} parent=39 // pred_region
        %s258 = smul.u32 32, %s14
        %p259 = scmp.lt.s32.totalorder %s258, 63
        %s260 = scalar_select %p259, %s258, 63
        %s261 = smul.addr %s260, 2
        %s262 = smul.addr %s261, 4
        %s263 = scalar_lea.vmem %s0, %s262
        %s264 = smul.u32 32, %s14
      $region44: #{fake_news_classifier_forward.1} parent=39 // pred_fallthru
        _
      // Predicated region
      $region45: #{fake_news_classifier_forward.1} parent=39 // pred_check
        %p265 = pneg %p60
      $region46: #{fake_news_classifier_forward.1} parent=39 // pred_check_branch
        %267 = sbr.rel (%p265) target = $region48
      $region47: #{fake_news_classifier_forward.1} parent=39 // pred_region
        %s268 = smul.u32 4, %s14
        %p269 = scmp.lt.s32.totalorder %s268, 7
        %s270 = scalar_select %p269, %s268, 7
        %s271 = smul.addr %s270, 8
        %s272 = scalar_lea.vmem %s1, %s271
        %s273 = smul.u32 4, %s14
      $region48: #{fake_news_classifier_forward.1} parent=39 // pred_fallthru
        _
    $region40: #{fake_news_classifier_forward.1} parent=5 // pred_fallthru
      _
    %p274 = scmp.le.s32.totalorder 1, %s14
    %p275 = scmp.lt.s32.totalorder %s14, 3
    %p276 = pnand %p274, %p275
    %p277 = pneg %p276
    // Predicated region
    $region49: #{fake_news_classifier_forward.1} parent=5 // pred_check
      _
    $region50: #{fake_news_classifier_forward.1} parent=5 // pred_check_branch
      %279 = sbr.rel (%p276) target = $region52
    $region51: #{fake_news_classifier_forward.1} parent=5 // pred_region
      %s280 = ssub.s32 %s14, 1
      %s281 = smul.u32 32, %s19
      %p282 = scmp.lt.s32.totalorder %s281, 63
      %s283 = scalar_select %p282, %s281, 63
      %s284 = smul.addr %s283, 2
      %s285 = smul.addr %s284, 4
      %s286 = scalar_lea.vmem %s0, %s285
      %p287 = pneg %p40
      %p288 = pneg %p37
      %s289 = smul.u32 4, %s19
      %p290 = scmp.lt.s32.totalorder %s289, 7
      %s291 = scalar_select %p290, %s289, 7
      %s292 = smul.addr %s291, 8
      %s293 = scalar_lea.vmem %s1, %s292
      %p294 = pneg %p66
      %p295 = pneg %p63
      %p296 = pneg %p87
      %p297 = pneg %p84
      %p298 = pneg %p108
      %p299 = pneg %p105
      %p300 = pneg %p129
      %p301 = pneg %p126
      %p302 = pneg %p150
      %p303 = pneg %p147
      %p304 = pneg %p171
      %p305 = pneg %p168
      %p306 = pneg %p192
      %p307 = pneg %p189
      %p308 = pneg %p218
      %p309 = pneg %p215
      %s310 = smul.u32 4, %s19
      %p311 = scmp.lt.s32.totalorder %s310, 7
      %s312 = scalar_select %p311, %s310, 7
      %s313 = smul.addr %s312, 8
      %s314 = scalar_lea.vmem %s8, %s313
      %s315 = smul.u32 32, %s19
      %p316 = scmp.lt.s32.totalorder %s315, 63
      %s317 = scalar_select %p316, %s315, 63
      %s318 = smul.addr %s317, 2
      %s319 = smul.addr %s318, 4
      %s320 = scalar_lea.vmem %s0, %s319
      %s321 = smul.u32 32, %s19
      %s322 = smul.u32 4, %s19
      %p323 = scmp.lt.s32.totalorder %s322, 7
      %s324 = scalar_select %p323, %s322, 7
      %s325 = smul.addr %s324, 8
      %s326 = scalar_lea.vmem %s1, %s325
      %s327 = smul.u32 4, %s19
      %s328 = smul.u32 4, %s19
      %p329 = scmp.lt.s32.totalorder %s328, 7
      %s330 = scalar_select %p329, %s328, 7
      %s331 = smul.addr %s330, 8
      %s332 = scalar_lea.vmem %s8, %s331
      %s333 = smul.u32 4, %s19
      %v335 = vld [vmem:[%s326] sm:$0xff]
      %v336 = vld [vmem:[%s326 + $0x8] sm:$0xff]
      %v337 = vld [vmem:[%s326 + $0x10] sm:$0xff]
      %v338 = vld [vmem:[%s326 + $0x18] sm:$0xff]
      %v339 = vlaneseq
      %v340 = vand.u32 %v339, 127
      %v341 = vcombine.high %v335, %v335
      %v343 = vunpack.c.l.s4 1966171168
      %v344 = vunpack.c.0.s8 %v343
      %v345 = vlaneseq
      %v346 = vshrl.u32 %v345, 7
      %v347 = vsub.s32 %v344, %v346
      %v348 = vrot.slane %v335, %v347
      %v350 = vunpack.c.l.s4 1966171168
      %v351 = vunpack.c.0.s8 %v350
      %v352 = vlaneseq
      %v353 = vshrl.u32 %v352, 7
      %v354 = vsub.s32 %v351, %v353
      %v355 = vrot.slane %v341, %v354
      %v356 = vcombine.high %v348, %v348
      %v357 = vcombine.high %v355, %v355
      %v359 = vunpack.c.l.s4 1966171168
      %v360 = vunpack.c.0.s8 %v359
      %v361 = vlaneseq
      %v362 = vshrl.u32 %v361, 7
      %v363 = vsub.s32 %v360, %v362
      %v364 = vrot.slane %v348, %v363
      %v366 = vunpack.c.l.s4 1966171168
      %v367 = vunpack.c.0.s8 %v366
      %v368 = vlaneseq
      %v369 = vshrl.u32 %v368, 7
      %v370 = vsub.s32 %v367, %v369
      %v371 = vrot.slane %v355, %v370
      %v373 = vunpack.c.l.s4 1966171168
      %v374 = vunpack.c.0.s8 %v373
      %v375 = vlaneseq
      %v376 = vshrl.u32 %v375, 7
      %v377 = vsub.s32 %v374, %v376
      %v378 = vrot.slane %v356, %v377
      %v380 = vunpack.c.l.s4 1966171168
      %v381 = vunpack.c.0.s8 %v380
      %v382 = vlaneseq
      %v383 = vshrl.u32 %v382, 7
      %v384 = vsub.s32 %v381, %v383
      %v385 = vrot.slane %v357, %v384
      %v386 = vcombine.high %v364, %v364
      %v387 = vcombine.high %v371, %v371
      %v388 = vcombine.high %v378, %v378
      %v389 = vcombine.high %v385, %v385
      %v390 = vcombine.high %v336, %v336
      %v392 = vunpack.c.l.s4 1966171168
      %v393 = vunpack.c.0.s8 %v392
      %v394 = vlaneseq
      %v395 = vshrl.u32 %v394, 7
      %v396 = vsub.s32 %v393, %v395
      %v397 = vrot.slane %v336, %v396
      %v399 = vunpack.c.l.s4 1966171168
      %v400 = vunpack.c.0.s8 %v399
      %v401 = vlaneseq
      %v402 = vshrl.u32 %v401, 7
      %v403 = vsub.s32 %v400, %v402
      %v404 = vrot.slane %v390, %v403
      %v405 = vcombine.high %v397, %v397
      %v406 = vcombine.high %v404, %v404
      %v408 = vunpack.c.l.s4 1966171168
      %v409 = vunpack.c.0.s8 %v408
      %v410 = vlaneseq
      %v411 = vshrl.u32 %v410, 7
      %v412 = vsub.s32 %v409, %v411
      %v413 = vrot.slane %v397, %v412
      %v415 = vunpack.c.l.s4 1966171168
      %v416 = vunpack.c.0.s8 %v415
      %v417 = vlaneseq
      %v418 = vshrl.u32 %v417, 7
      %v419 = vsub.s32 %v416, %v418
      %v420 = vrot.slane %v404, %v419
      %v422 = vunpack.c.l.s4 1966171168
      %v423 = vunpack.c.0.s8 %v422
      %v424 = vlaneseq
      %v425 = vshrl.u32 %v424, 7
      %v426 = vsub.s32 %v423, %v425
      %v427 = vrot.slane %v405, %v426
      %v429 = vunpack.c.l.s4 1966171168
      %v430 = vunpack.c.0.s8 %v429
      %v431 = vlaneseq
      %v432 = vshrl.u32 %v431, 7
      %v433 = vsub.s32 %v430, %v432
      %v434 = vrot.slane %v406, %v433
      %v435 = vcombine.high %v413, %v413
      %v436 = vcombine.high %v420, %v420
      %v437 = vcombine.high %v427, %v427
      %v438 = vcombine.high %v434, %v434
      %v439 = vcombine.high %v337, %v337
      %v441 = vunpack.c.l.s4 1966171168
      %v442 = vunpack.c.0.s8 %v441
      %v443 = vlaneseq
      %v444 = vshrl.u32 %v443, 7
      %v445 = vsub.s32 %v442, %v444
      %v446 = vrot.slane %v337, %v445
      %v448 = vunpack.c.l.s4 1966171168
      %v449 = vunpack.c.0.s8 %v448
      %v450 = vlaneseq
      %v451 = vshrl.u32 %v450, 7
      %v452 = vsub.s32 %v449, %v451
      %v453 = vrot.slane %v439, %v452
      %v454 = vcombine.high %v446, %v446
      %v455 = vcombine.high %v453, %v453
      %v457 = vunpack.c.l.s4 1966171168
      %v458 = vunpack.c.0.s8 %v457
      %v459 = vlaneseq
      %v460 = vshrl.u32 %v459, 7
      %v461 = vsub.s32 %v458, %v460
      %v462 = vrot.slane %v446, %v461
      %v464 = vunpack.c.l.s4 1966171168
      %v465 = vunpack.c.0.s8 %v464
      %v466 = vlaneseq
      %v467 = vshrl.u32 %v466, 7
      %v468 = vsub.s32 %v465, %v467
      %v469 = vrot.slane %v453, %v468
      %v471 = vunpack.c.l.s4 1966171168
      %v472 = vunpack.c.0.s8 %v471
      %v473 = vlaneseq
      %v474 = vshrl.u32 %v473, 7
      %v475 = vsub.s32 %v472, %v474
      %v476 = vrot.slane %v454, %v475
      %v478 = vunpack.c.l.s4 1966171168
      %v479 = vunpack.c.0.s8 %v478
      %v480 = vlaneseq
      %v481 = vshrl.u32 %v480, 7
      %v482 = vsub.s32 %v479, %v481
      %v483 = vrot.slane %v455, %v482
      %v484 = vcombine.high %v462, %v462
      %v485 = vcombine.high %v469, %v469
      %v486 = vcombine.high %v476, %v476
      %v487 = vcombine.high %v483, %v483
      %v488 = vcombine.high %v338, %v338
      %v490 = vunpack.c.l.s4 1966171168
      %v491 = vunpack.c.0.s8 %v490
      %v492 = vlaneseq
      %v493 = vshrl.u32 %v492, 7
      %v494 = vsub.s32 %v491, %v493
      %v495 = vrot.slane %v338, %v494
      %v497 = vunpack.c.l.s4 1966171168
      %v498 = vunpack.c.0.s8 %v497
      %v499 = vlaneseq
      %v500 = vshrl.u32 %v499, 7
      %v501 = vsub.s32 %v498, %v500
      %v502 = vrot.slane %v488, %v501
      %v503 = vcombine.high %v495, %v495
      %v504 = vcombine.high %v502, %v502
      %v506 = vunpack.c.l.s4 1966171168
      %v507 = vunpack.c.0.s8 %v506
      %v508 = vlaneseq
      %v509 = vshrl.u32 %v508, 7
      %v510 = vsub.s32 %v507, %v509
      %v511 = vrot.slane %v495, %v510
      %v513 = vunpack.c.l.s4 1966171168
      %v514 = vunpack.c.0.s8 %v513
      %v515 = vlaneseq
      %v516 = vshrl.u32 %v515, 7
      %v517 = vsub.s32 %v514, %v516
      %v518 = vrot.slane %v502, %v517
      %v520 = vunpack.c.l.s4 1966171168
      %v521 = vunpack.c.0.s8 %v520
      %v522 = vlaneseq
      %v523 = vshrl.u32 %v522, 7
      %v524 = vsub.s32 %v521, %v523
      %v525 = vrot.slane %v503, %v524
      %v527 = vunpack.c.l.s4 1966171168
      %v528 = vunpack.c.0.s8 %v527
      %v529 = vlaneseq
      %v530 = vshrl.u32 %v529, 7
      %v531 = vsub.s32 %v528, %v530
      %v532 = vrot.slane %v504, %v531
      %v533 = vcombine.high %v511, %v511
      %v534 = vcombine.high %v518, %v518
      %v535 = vcombine.high %v525, %v525
      %v536 = vcombine.high %v532, %v532
      %537 = vset.pattern.permute.xlu0 0
      %538 = vperm.xlu0 %537, %v364
      %v539 = vpop.permute.xlu0 %538
      %v540 = vlaneseq
      %v541 = vshrl.u32 %v540, 7
      %v542 = vsub.s32 0, %v541
      %v543 = vrot.slane %v539, %v542
      %544 = vset.pattern.permute.xlu0 0
      %545 = vperm.xlu0 %544, %v378
      %v546 = vpop.permute.xlu0 %545
      %v547 = vlaneseq
      %v548 = vshrl.u32 %v547, 7
      %v549 = vsub.s32 0, %v548
      %v550 = vrot.slane %v546, %v549
      %551 = vset.pattern.permute.xlu0 0
      %552 = vperm.xlu0 %551, %v386
      %v553 = vpop.permute.xlu0 %552
      %v554 = vlaneseq
      %v555 = vshrl.u32 %v554, 7
      %v556 = vsub.s32 0, %v555
      %v557 = vrot.slane %v553, %v556
      %558 = vset.pattern.permute.xlu0 0
      %559 = vperm.xlu0 %558, %v388
      %v560 = vpop.permute.xlu0 %559
      %v561 = vlaneseq
      %v562 = vshrl.u32 %v561, 7
      %v563 = vsub.s32 0, %v562
      %v564 = vrot.slane %v560, %v563
      %565 = vset.pattern.permute.xlu0 0
      %566 = vperm.xlu0 %565, %v371
      %v567 = vpop.permute.xlu0 %566
      %v568 = vlaneseq
      %v569 = vshrl.u32 %v568, 7
      %v570 = vsub.s32 0, %v569
      %v571 = vrot.slane %v567, %v570
      %572 = vset.pattern.permute.xlu0 0
      %573 = vperm.xlu0 %572, %v385
      %v574 = vpop.permute.xlu0 %573
      %v575 = vlaneseq
      %v576 = vshrl.u32 %v575, 7
      %v577 = vsub.s32 0, %v576
      %v578 = vrot.slane %v574, %v577
      %579 = vset.pattern.permute.xlu0 0
      %580 = vperm.xlu0 %579, %v387
      %v581 = vpop.permute.xlu0 %580
      %v582 = vlaneseq
      %v583 = vshrl.u32 %v582, 7
      %v584 = vsub.s32 0, %v583
      %v585 = vrot.slane %v581, %v584
      %586 = vset.pattern.permute.xlu0 0
      %587 = vperm.xlu0 %586, %v389
      %v588 = vpop.permute.xlu0 %587
      %v589 = vlaneseq
      %v590 = vshrl.u32 %v589, 7
      %v591 = vsub.s32 0, %v590
      %v592 = vrot.slane %v588, %v591
      %593 = vset.pattern.permute.xlu0 0
      %594 = vperm.xlu0 %593, %v413
      %v595 = vpop.permute.xlu0 %594
      %v596 = vlaneseq
      %v597 = vshrl.u32 %v596, 7
      %v598 = vsub.s32 0, %v597
      %v599 = vrot.slane %v595, %v598
      %600 = vset.pattern.permute.xlu0 0
      %601 = vperm.xlu0 %600, %v427
      %v602 = vpop.permute.xlu0 %601
      %v603 = vlaneseq
      %v604 = vshrl.u32 %v603, 7
      %v605 = vsub.s32 0, %v604
      %v606 = vrot.slane %v602, %v605
      %607 = vset.pattern.permute.xlu0 0
      %608 = vperm.xlu0 %607, %v435
      %v609 = vpop.permute.xlu0 %608
      %v610 = vlaneseq
      %v611 = vshrl.u32 %v610, 7
      %v612 = vsub.s32 0, %v611
      %v613 = vrot.slane %v609, %v612
      %614 = vset.pattern.permute.xlu0 0
      %615 = vperm.xlu0 %614, %v437
      %v616 = vpop.permute.xlu0 %615
      %v617 = vlaneseq
      %v618 = vshrl.u32 %v617, 7
      %v619 = vsub.s32 0, %v618
      %v620 = vrot.slane %v616, %v619
      %621 = vset.pattern.permute.xlu0 0
      %622 = vperm.xlu0 %621, %v420
      %v623 = vpop.permute.xlu0 %622
      %v624 = vlaneseq
      %v625 = vshrl.u32 %v624, 7
      %v626 = vsub.s32 0, %v625
      %v627 = vrot.slane %v623, %v626
      %628 = vset.pattern.permute.xlu0 0
      %629 = vperm.xlu0 %628, %v434
      %v630 = vpop.permute.xlu0 %629
      %v631 = vlaneseq
      %v632 = vshrl.u32 %v631, 7
      %v633 = vsub.s32 0, %v632
      %v634 = vrot.slane %v630, %v633
      %635 = vset.pattern.permute.xlu0 0
      %636 = vperm.xlu0 %635, %v436
      %v637 = vpop.permute.xlu0 %636
      %v638 = vlaneseq
      %v639 = vshrl.u32 %v638, 7
      %v640 = vsub.s32 0, %v639
      %v641 = vrot.slane %v637, %v640
      %642 = vset.pattern.permute.xlu0 0
      %643 = vperm.xlu0 %642, %v438
      %v644 = vpop.permute.xlu0 %643
      %v645 = vlaneseq
      %v646 = vshrl.u32 %v645, 7
      %v647 = vsub.s32 0, %v646
      %v648 = vrot.slane %v644, %v647
      %649 = vset.pattern.permute.xlu0 0
      %650 = vperm.xlu0 %649, %v462
      %v651 = vpop.permute.xlu0 %650
      %v652 = vlaneseq
      %v653 = vshrl.u32 %v652, 7
      %v654 = vsub.s32 0, %v653
      %v655 = vrot.slane %v651, %v654
      %656 = vset.pattern.permute.xlu0 0
      %657 = vperm.xlu0 %656, %v476
      %v658 = vpop.permute.xlu0 %657
      %v659 = vlaneseq
      %v660 = vshrl.u32 %v659, 7
      %v661 = vsub.s32 0, %v660
      %v662 = vrot.slane %v658, %v661
      %663 = vset.pattern.permute.xlu0 0
      %664 = vperm.xlu0 %663, %v484
      %v665 = vpop.permute.xlu0 %664
      %v666 = vlaneseq
      %v667 = vshrl.u32 %v666, 7
      %v668 = vsub.s32 0, %v667
      %v669 = vrot.slane %v665, %v668
      %670 = vset.pattern.permute.xlu0 0
      %671 = vperm.xlu0 %670, %v486
      %v672 = vpop.permute.xlu0 %671
      %v673 = vlaneseq
      %v674 = vshrl.u32 %v673, 7
      %v675 = vsub.s32 0, %v674
      %v676 = vrot.slane %v672, %v675
      %677 = vset.pattern.permute.xlu0 0
      %678 = vperm.xlu0 %677, %v469
      %v679 = vpop.permute.xlu0 %678
      %v680 = vlaneseq
      %v681 = vshrl.u32 %v680, 7
      %v682 = vsub.s32 0, %v681
      %v683 = vrot.slane %v679, %v682
      %684 = vset.pattern.permute.xlu0 0
      %685 = vperm.xlu0 %684, %v483
      %v686 = vpop.permute.xlu0 %685
      %v687 = vlaneseq
      %v688 = vshrl.u32 %v687, 7
      %v689 = vsub.s32 0, %v688
      %v690 = vrot.slane %v686, %v689
      %691 = vset.pattern.permute.xlu0 0
      %692 = vperm.xlu0 %691, %v485
      %v693 = vpop.permute.xlu0 %692
      %v694 = vlaneseq
      %v695 = vshrl.u32 %v694, 7
      %v696 = vsub.s32 0, %v695
      %v697 = vrot.slane %v693, %v696
      %698 = vset.pattern.permute.xlu0 0
      %699 = vperm.xlu0 %698, %v487
      %v700 = vpop.permute.xlu0 %699
      %v701 = vlaneseq
      %v702 = vshrl.u32 %v701, 7
      %v703 = vsub.s32 0, %v702
      %v704 = vrot.slane %v700, %v703
      %705 = vset.pattern.permute.xlu0 0
      %706 = vperm.xlu0 %705, %v511
      %v707 = vpop.permute.xlu0 %706
      %v708 = vlaneseq
      %v709 = vshrl.u32 %v708, 7
      %v710 = vsub.s32 0, %v709
      %v711 = vrot.slane %v707, %v710
      %712 = vset.pattern.permute.xlu0 0
      %713 = vperm.xlu0 %712, %v525
      %v714 = vpop.permute.xlu0 %713
      %v715 = vlaneseq
      %v716 = vshrl.u32 %v715, 7
      %v717 = vsub.s32 0, %v716
      %v718 = vrot.slane %v714, %v717
      %719 = vset.pattern.permute.xlu0 0
      %720 = vperm.xlu0 %719, %v533
      %v721 = vpop.permute.xlu0 %720
      %v722 = vlaneseq
      %v723 = vshrl.u32 %v722, 7
      %v724 = vsub.s32 0, %v723
      %v725 = vrot.slane %v721, %v724
      %726 = vset.pattern.permute.xlu0 0
      %727 = vperm.xlu0 %726, %v535
      %v728 = vpop.permute.xlu0 %727
      %v729 = vlaneseq
      %v730 = vshrl.u32 %v729, 7
      %v731 = vsub.s32 0, %v730
      %v732 = vrot.slane %v728, %v731
      %733 = vset.pattern.permute.xlu0 0
      %734 = vperm.xlu0 %733, %v518
      %v735 = vpop.permute.xlu0 %734
      %v736 = vlaneseq
      %v737 = vshrl.u32 %v736, 7
      %v738 = vsub.s32 0, %v737
      %v739 = vrot.slane %v735, %v738
      %740 = vset.pattern.permute.xlu0 0
      %741 = vperm.xlu0 %740, %v532
      %v742 = vpop.permute.xlu0 %741
      %v743 = vlaneseq
      %v744 = vshrl.u32 %v743, 7
      %v745 = vsub.s32 0, %v744
      %v746 = vrot.slane %v742, %v745
      %747 = vset.pattern.permute.xlu0 0
      %748 = vperm.xlu0 %747, %v534
      %v749 = vpop.permute.xlu0 %748
      %v750 = vlaneseq
      %v751 = vshrl.u32 %v750, 7
      %v752 = vsub.s32 0, %v751
      %v753 = vrot.slane %v749, %v752
      %754 = vset.pattern.permute.xlu0 0
      %755 = vperm.xlu0 %754, %v536
      %v756 = vpop.permute.xlu0 %755
      %v757 = vlaneseq
      %v758 = vshrl.u32 %v757, 7
      %v759 = vsub.s32 0, %v758
      %v760 = vrot.slane %v756, %v759
      %vm761 = vcmp.lt.s32.totalorder %v340, %v543
      %vm762 = vcmp.lt.s32.totalorder %v340, %v550
      %vm763 = vcmp.lt.s32.totalorder %v340, %v557
      %vm764 = vcmp.lt.s32.totalorder %v340, %v564
      %vm765 = vcmp.lt.s32.totalorder %v340, %v571
      %vm766 = vcmp.lt.s32.totalorder %v340, %v578
      %vm767 = vcmp.lt.s32.totalorder %v340, %v585
      %vm768 = vcmp.lt.s32.totalorder %v340, %v592
      %vm769 = vcmp.lt.s32.totalorder %v340, %v599
      %vm770 = vcmp.lt.s32.totalorder %v340, %v606
      %vm771 = vcmp.lt.s32.totalorder %v340, %v613
      %vm772 = vcmp.lt.s32.totalorder %v340, %v620
      %vm773 = vcmp.lt.s32.totalorder %v340, %v627
      %vm774 = vcmp.lt.s32.totalorder %v340, %v634
      %vm775 = vcmp.lt.s32.totalorder %v340, %v641
      %vm776 = vcmp.lt.s32.totalorder %v340, %v648
      %vm777 = vcmp.lt.s32.totalorder %v340, %v655
      %vm778 = vcmp.lt.s32.totalorder %v340, %v662
      %vm779 = vcmp.lt.s32.totalorder %v340, %v669
      %vm780 = vcmp.lt.s32.totalorder %v340, %v676
      %vm781 = vcmp.lt.s32.totalorder %v340, %v683
      %vm782 = vcmp.lt.s32.totalorder %v340, %v690
      %vm783 = vcmp.lt.s32.totalorder %v340, %v697
      %vm784 = vcmp.lt.s32.totalorder %v340, %v704
      %vm785 = vcmp.lt.s32.totalorder %v340, %v711
      %vm786 = vcmp.lt.s32.totalorder %v340, %v718
      %vm787 = vcmp.lt.s32.totalorder %v340, %v725
      %vm788 = vcmp.lt.s32.totalorder %v340, %v732
      %vm789 = vcmp.lt.s32.totalorder %v340, %v739
      %vm790 = vcmp.lt.s32.totalorder %v340, %v746
      %vm791 = vcmp.lt.s32.totalorder %v340, %v753
      %vm792 = vcmp.lt.s32.totalorder %v340, %v760
      %v793 = vsel %vm761, 1, 0
      %v794 = vsel %vm762, 1, 0
      %v795 = vsel %vm763, 1, 0
      %v796 = vsel %vm764, 1, 0
      %v797 = vsel %vm765, 1, 0
      %v798 = vsel %vm766, 1, 0
      %v799 = vsel %vm767, 1, 0
      %v800 = vsel %vm768, 1, 0
      %v801 = vsel %vm769, 1, 0
      %v802 = vsel %vm770, 1, 0
      %v803 = vsel %vm771, 1, 0
      %v804 = vsel %vm772, 1, 0
      %v805 = vsel %vm773, 1, 0
      %v806 = vsel %vm774, 1, 0
      %v807 = vsel %vm775, 1, 0
      %v808 = vsel %vm776, 1, 0
      %v809 = vsel %vm777, 1, 0
      %v810 = vsel %vm778, 1, 0
      %v811 = vsel %vm779, 1, 0
      %v812 = vsel %vm780, 1, 0
      %v813 = vsel %vm781, 1, 0
      %v814 = vsel %vm782, 1, 0
      %v815 = vsel %vm783, 1, 0
      %v816 = vsel %vm784, 1, 0
      %v817 = vsel %vm785, 1, 0
      %v818 = vsel %vm786, 1, 0
      %v819 = vsel %vm787, 1, 0
      %v820 = vsel %vm788, 1, 0
      %v821 = vsel %vm789, 1, 0
      %v822 = vsel %vm790, 1, 0
      %v823 = vsel %vm791, 1, 0
      %v824 = vsel %vm792, 1, 0
      %v825 = vcvt.s32.f32 %v793
      %v826 = vcvt.s32.f32 %v794
      %v827 = vcvt.s32.f32 %v795
      %v828 = vcvt.s32.f32 %v796
      %v829 = vcvt.s32.f32 %v797
      %v830 = vcvt.s32.f32 %v798
      %v831 = vcvt.s32.f32 %v799
      %v832 = vcvt.s32.f32 %v800
      %v833 = vcvt.s32.f32 %v801
      %v834 = vcvt.s32.f32 %v802
      %v835 = vcvt.s32.f32 %v803
      %v836 = vcvt.s32.f32 %v804
      %v837 = vcvt.s32.f32 %v805
      %v838 = vcvt.s32.f32 %v806
      %v839 = vcvt.s32.f32 %v807
      %v840 = vcvt.s32.f32 %v808
      %v841 = vcvt.s32.f32 %v809
      %v842 = vcvt.s32.f32 %v810
      %v843 = vcvt.s32.f32 %v811
      %v844 = vcvt.s32.f32 %v812
      %v845 = vcvt.s32.f32 %v813
      %v846 = vcvt.s32.f32 %v814
      %v847 = vcvt.s32.f32 %v815
      %v848 = vcvt.s32.f32 %v816
      %v849 = vcvt.s32.f32 %v817
      %v850 = vcvt.s32.f32 %v818
      %v851 = vcvt.s32.f32 %v819
      %v852 = vcvt.s32.f32 %v820
      %v853 = vcvt.s32.f32 %v821
      %v854 = vcvt.s32.f32 %v822
      %v855 = vcvt.s32.f32 %v823
      %v856 = vcvt.s32.f32 %v824
      %v857 = vpack.c.bf16 %v825, %v825
      %v858 = vpack.c.bf16 %v826, %v826
      %v859 = vpack.c.bf16 %v827, %v827
      %v860 = vpack.c.bf16 %v828, %v828
      %v861 = vpack.c.bf16 %v829, %v829
      %v862 = vpack.c.bf16 %v830, %v830
      %v863 = vpack.c.bf16 %v831, %v831
      %v864 = vpack.c.bf16 %v832, %v832
      %v865 = vpack.c.bf16 %v833, %v833
      %v866 = vpack.c.bf16 %v834, %v834
      %v867 = vpack.c.bf16 %v835, %v835
      %v868 = vpack.c.bf16 %v836, %v836
      %v869 = vpack.c.bf16 %v837, %v837
      %v870 = vpack.c.bf16 %v838, %v838
      %v871 = vpack.c.bf16 %v839, %v839
      %v872 = vpack.c.bf16 %v840, %v840
      %v873 = vpack.c.bf16 %v841, %v841
      %v874 = vpack.c.bf16 %v842, %v842
      %v875 = vpack.c.bf16 %v843, %v843
      %v876 = vpack.c.bf16 %v844, %v844
      %v877 = vpack.c.bf16 %v845, %v845
      %v878 = vpack.c.bf16 %v846, %v846
      %v879 = vpack.c.bf16 %v847, %v847
      %v880 = vpack.c.bf16 %v848, %v848
      %v881 = vpack.c.bf16 %v849, %v849
      %v882 = vpack.c.bf16 %v850, %v850
      %v883 = vpack.c.bf16 %v851, %v851
      %v884 = vpack.c.bf16 %v852, %v852
      %v885 = vpack.c.bf16 %v853, %v853
      %v886 = vpack.c.bf16 %v854, %v854
      %v887 = vpack.c.bf16 %v855, %v855
      %v888 = vpack.c.bf16 %v856, %v856
      %v889 = vld [vmem:[%s320] sm:$0xf]
      %v890 = vld [vmem:[%s320 + $0x4] sm:$0xf]
      %v891 = vld [vmem:[%s320 + $0x8] sm:$0xf]
      %v892 = vld [vmem:[%s320 + $0xc] sm:$0xf]
      %v893 = vld [vmem:[%s320 + $0x10] sm:$0xf]
      %v894 = vld [vmem:[%s320 + $0x14] sm:$0xf]
      %v895 = vld [vmem:[%s320 + $0x18] sm:$0xf]
      %v896 = vld [vmem:[%s320 + $0x1c] sm:$0xf]
      %v897 = vld [vmem:[%s320 + $0x20] sm:$0xf]
      %v898 = vld [vmem:[%s320 + $0x24] sm:$0xf]
      %v899 = vld [vmem:[%s320 + $0x28] sm:$0xf]
      %v900 = vld [vmem:[%s320 + $0x2c] sm:$0xf]
      %v901 = vld [vmem:[%s320 + $0x30] sm:$0xf]
      %v902 = vld [vmem:[%s320 + $0x34] sm:$0xf]
      %v903 = vld [vmem:[%s320 + $0x38] sm:$0xf]
      %v904 = vld [vmem:[%s320 + $0x3c] sm:$0xf]
      %v905 = vld [vmem:[%s320 + $0x40] sm:$0xf]
      %v906 = vld [vmem:[%s320 + $0x44] sm:$0xf]
      %v907 = vld [vmem:[%s320 + $0x48] sm:$0xf]
      %v908 = vld [vmem:[%s320 + $0x4c] sm:$0xf]
      %v909 = vld [vmem:[%s320 + $0x50] sm:$0xf]
      %v910 = vld [vmem:[%s320 + $0x54] sm:$0xf]
      %v911 = vld [vmem:[%s320 + $0x58] sm:$0xf]
      %v912 = vld [vmem:[%s320 + $0x5c] sm:$0xf]
      %v913 = vld [vmem:[%s320 + $0x60] sm:$0xf]
      %v914 = vld [vmem:[%s320 + $0x64] sm:$0xf]
      %v915 = vld [vmem:[%s320 + $0x68] sm:$0xf]
      %v916 = vld [vmem:[%s320 + $0x6c] sm:$0xf]
      %v917 = vld [vmem:[%s320 + $0x70] sm:$0xf]
      %v918 = vld [vmem:[%s320 + $0x74] sm:$0xf]
      %v919 = vld [vmem:[%s320 + $0x78] sm:$0xf]
      %v920 = vld [vmem:[%s320 + $0x7c] sm:$0xf]
      %v921 = vld [vmem:[%s320 + $0x80] sm:$0xf]
      %v922 = vld [vmem:[%s320 + $0x84] sm:$0xf]
      %v923 = vld [vmem:[%s320 + $0x88] sm:$0xf]
      %v924 = vld [vmem:[%s320 + $0x8c] sm:$0xf]
      %v925 = vld [vmem:[%s320 + $0x90] sm:$0xf]
      %v926 = vld [vmem:[%s320 + $0x94] sm:$0xf]
      %v927 = vld [vmem:[%s320 + $0x98] sm:$0xf]
      %v928 = vld [vmem:[%s320 + $0x9c] sm:$0xf]
      %v929 = vld [vmem:[%s320 + $0xa0] sm:$0xf]
      %v930 = vld [vmem:[%s320 + $0xa4] sm:$0xf]
      %v931 = vld [vmem:[%s320 + $0xa8] sm:$0xf]
      %v932 = vld [vmem:[%s320 + $0xac] sm:$0xf]
      %v933 = vld [vmem:[%s320 + $0xb0] sm:$0xf]
      %v934 = vld [vmem:[%s320 + $0xb4] sm:$0xf]
      %v935 = vld [vmem:[%s320 + $0xb8] sm:$0xf]
      %v936 = vld [vmem:[%s320 + $0xbc] sm:$0xf]
      %v937 = vld [vmem:[%s320 + $0xc0] sm:$0xf]
      %v938 = vld [vmem:[%s320 + $0xc4] sm:$0xf]
      %v939 = vld [vmem:[%s320 + $0xc8] sm:$0xf]
      %v940 = vld [vmem:[%s320 + $0xcc] sm:$0xf]
      %v941 = vld [vmem:[%s320 + $0xd0] sm:$0xf]
      %v942 = vld [vmem:[%s320 + $0xd4] sm:$0xf]
      %v943 = vld [vmem:[%s320 + $0xd8] sm:$0xf]
      %v944 = vld [vmem:[%s320 + $0xdc] sm:$0xf]
      %v945 = vld [vmem:[%s320 + $0xe0] sm:$0xf]
      %v946 = vld [vmem:[%s320 + $0xe4] sm:$0xf]
      %v947 = vld [vmem:[%s320 + $0xe8] sm:$0xf]
      %v948 = vld [vmem:[%s320 + $0xec] sm:$0xf]
      %v949 = vld [vmem:[%s320 + $0xf0] sm:$0xf]
      %v950 = vld [vmem:[%s320 + $0xf4] sm:$0xf]
      %v951 = vld [vmem:[%s320 + $0xf8] sm:$0xf]
      %v952 = vld [vmem:[%s320 + $0xfc] sm:$0xf]
      %v955 = vunpack.c.l.b16 %v889
      %v956 = vunpack.c.l.b16 %v890
      %v957 = vpack.c.b16 %v956, %v955
      %vm959 = vcmask 130048
      %v961 = vsel %vm959, %v857, 0
      %963 = vmatprep.subr.bf16.mxu0 0
      %964 = vmatpush1.bf16.msra.mxu0 %v957
      %965 = vmatprep.subr.bf16.mxu0 0
      %966 = vmatpush1.bf16.msra.mxu0 0
      %967 = vmatprep.subr.bf16.mxu0 0
      %968 = vmatpush1.bf16.msra.mxu0 0
      %969 = vmatprep.subr.bf16.mxu0 0
      %970 = vmatpush1.bf16.msra.mxu0 0
      %971 = vmatprep.subr.bf16.mxu0 0
      %972 = vmatpush1.bf16.msra.mxu0 0
      %973 = vmatprep.subr.bf16.mxu0 0
      %974 = vmatpush1.bf16.msra.mxu0 0
      %975 = vmatprep.subr.bf16.mxu0 0
      %976 = vmatpush1.bf16.msra.mxu0 0
      %977 = vmatprep.subr.bf16.mxu0 0
      %978 = vmatpush1.bf16.msra.mxu0 0
      %979 = vmatprep.subr.bf16.mxu0 0
      %980 = vmatpush1.bf16.msra.mxu0 0
      %981 = vmatprep.subr.bf16.mxu0 0
      %982 = vmatpush1.bf16.msra.mxu0 0
      %983 = vmatprep.subr.bf16.mxu0 0
      %984 = vmatpush1.bf16.msra.mxu0 0
      %985 = vmatprep.subr.bf16.mxu0 0
      %986 = vmatpush1.bf16.msra.mxu0 0
      %987 = vmatprep.subr.bf16.mxu0 0
      %988 = vmatpush1.bf16.msra.mxu0 0
      %989 = vmatprep.subr.bf16.mxu0 0
      %990 = vmatpush1.bf16.msra.mxu0 0
      %991 = vmatprep.subr.bf16.mxu0 0
      %992 = vmatpush1.bf16.msra.mxu0 0
      %993 = vmatprep.subr.bf16.mxu0 0
      %994 = vmatpush1.bf16.msra.mxu0 0
      %995 = vmatprep.mubr.bf16.mxu0 0
      %996 = vmatmul.mubr.bf16.gmra.mrb[0].mxu0 %v961
      %v997 = vpop.f32.mrb[0].mxu0
      %v998 = vadd.f32 0.0, %v997
      %v999 = vpop.f32.mrb[0].mxu0
      %v1000 = vpop.f32.mrb[0].mxu0
      %v1001 = vpop.f32.mrb[0].mxu0
      %1002 = vdwg.mxu0
      %v1005 = vunpack.c.l.b16 %v891
      %v1006 = vunpack.c.l.b16 %v892
      %v1007 = vpack.c.b16 %v1006, %v1005
      %v1010 = vsel %vm959, %v858, 0
      %1012 = vmatprep.subr.bf16.mxu0 0
      %1013 = vmatpush1.bf16.msra.mxu0 %v1007
      %1014 = vmatprep.subr.bf16.mxu0 0
      %1015 = vmatpush1.bf16.msra.mxu0 0
      %1016 = vmatprep.subr.bf16.mxu0 0
      %1017 = vmatpush1.bf16.msra.mxu0 0
      %1018 = vmatprep.subr.bf16.mxu0 0
      %1019 = vmatpush1.bf16.msra.mxu0 0
      %1020 = vmatprep.subr.bf16.mxu0 0
      %1021 = vmatpush1.bf16.msra.mxu0 0
      %1022 = vmatprep.subr.bf16.mxu0 0
      %1023 = vmatpush1.bf16.msra.mxu0 0
      %1024 = vmatprep.subr.bf16.mxu0 0
      %1025 = vmatpush1.bf16.msra.mxu0 0
      %1026 = vmatprep.subr.bf16.mxu0 0
      %1027 = vmatpush1.bf16.msra.mxu0 0
      %1028 = vmatprep.subr.bf16.mxu0 0
      %1029 = vmatpush1.bf16.msra.mxu0 0
      %1030 = vmatprep.subr.bf16.mxu0 0
      %1031 = vmatpush1.bf16.msra.mxu0 0
      %1032 = vmatprep.subr.bf16.mxu0 0
      %1033 = vmatpush1.bf16.msra.mxu0 0
      %1034 = vmatprep.subr.bf16.mxu0 0
      %1035 = vmatpush1.bf16.msra.mxu0 0
      %1036 = vmatprep.subr.bf16.mxu0 0
      %1037 = vmatpush1.bf16.msra.mxu0 0
      %1038 = vmatprep.subr.bf16.mxu0 0
      %1039 = vmatpush1.bf16.msra.mxu0 0
      %1040 = vmatprep.subr.bf16.mxu0 0
      %1041 = vmatpush1.bf16.msra.mxu0 0
      %1042 = vmatprep.subr.bf16.mxu0 0
      %1043 = vmatpush1.bf16.msra.mxu0 0
      %1044 = vmatprep.mubr.bf16.mxu0 0
      %1045 = vmatmul.mubr.bf16.gmra.mrb[0].mxu0 %v1010
      %v1046 = vpop.f32.mrb[0].mxu0
      %v1047 = vadd.f32 0.0, %v1046
      %v1048 = vpop.f32.mrb[0].mxu0
      %v1049 = vpop.f32.mrb[0].mxu0
      %v1050 = vpop.f32.mrb[0].mxu0
      %1051 = vdwg.mxu0
      %v1054 = vunpack.c.l.b16 %v893
      %v1055 = vunpack.c.l.b16 %v894
      %v1056 = vpack.c.b16 %v1055, %v1054
      %v1059 = vsel %vm959, %v859, 0
      %1061 = vmatprep.subr.bf16.mxu0 0
      %1062 = vmatpush1.bf16.msra.mxu0 %v1056
      %1063 = vmatprep.subr.bf16.mxu0 0
      %1064 = vmatpush1.bf16.msra.mxu0 0
      %1065 = vmatprep.subr.bf16.mxu0 0
      %1066 = vmatpush1.bf16.msra.mxu0 0
      %1067 = vmatprep.subr.bf16.mxu0 0
      %1068 = vmatpush1.bf16.msra.mxu0 0
      %1069 = vmatprep.subr.bf16.mxu0 0
      %1070 = vmatpush1.bf16.msra.mxu0 0
      %1071 = vmatprep.subr.bf16.mxu0 0
      %1072 = vmatpush1.bf16.msra.mxu0 0
      %1073 = vmatprep.subr.bf16.mxu0 0
      %1074 = vmatpush1.bf16.msra.mxu0 0
      %1075 = vmatprep.subr.bf16.mxu0 0
      %1076 = vmatpush1.bf16.msra.mxu0 0
      %1077 = vmatprep.subr.bf16.mxu0 0
      %1078 = vmatpush1.bf16.msra.mxu0 0
      %1079 = vmatprep.subr.bf16.mxu0 0
      %1080 = vmatpush1.bf16.msra.mxu0 0
      %1081 = vmatprep.subr.bf16.mxu0 0
      %1082 = vmatpush1.bf16.msra.mxu0 0
      %1083 = vmatprep.subr.bf16.mxu0 0
      %1084 = vmatpush1.bf16.msra.mxu0 0
      %1085 = vmatprep.subr.bf16.mxu0 0
      %1086 = vmatpush1.bf16.msra.mxu0 0
      %1087 = vmatprep.subr.bf16.mxu0 0
      %1088 = vmatpush1.bf16.msra.mxu0 0
      %1089 = vmatprep.subr.bf16.mxu0 0
      %1090 = vmatpush1.bf16.msra.mxu0 0
      %1091 = vmatprep.subr.bf16.mxu0 0
      %1092 = vmatpush1.bf16.msra.mxu0 0
      %1093 = vmatprep.mubr.bf16.mxu0 0
      %1094 = vmatmul.mubr.bf16.gmra.mrb[0].mxu0 %v1059
      %v1095 = vpop.f32.mrb[0].mxu0
      %v1096 = vadd.f32 0.0, %v1095
      %v1097 = vpop.f32.mrb[0].mxu0
      %v1098 = vpop.f32.mrb[0].mxu0
      %v1099 = vpop.f32.mrb[0].mxu0
      %1100 = vdwg.mxu0
      %v1103 = vunpack.c.l.b16 %v895
      %v1104 = vunpack.c.l.b16 %v896
      %v1105 = vpack.c.b16 %v1104, %v1103
      %v1108 = vsel %vm959, %v860, 0
      %1110 = vmatprep.subr.bf16.mxu0 0
      %1111 = vmatpush1.bf16.msra.mxu0 %v1105
      %1112 = vmatprep.subr.bf16.mxu0 0
      %1113 = vmatpush1.bf16.msra.mxu0 0
      %1114 = vmatprep.subr.bf16.mxu0 0
      %1115 = vmatpush1.bf16.msra.mxu0 0
      %1116 = vmatprep.subr.bf16.mxu0 0
      %1117 = vmatpush1.bf16.msra.mxu0 0
      %1118 = vmatprep.subr.bf16.mxu0 0
      %1119 = vmatpush1.bf16.msra.mxu0 0
      %1120 = vmatprep.subr.bf16.mxu0 0
      %1121 = vmatpush1.bf16.msra.mxu0 0
      %1122 = vmatprep.subr.bf16.mxu0 0
      %1123 = vmatpush1.bf16.msra.mxu0 0
      %1124 = vmatprep.subr.bf16.mxu0 0
      %1125 = vmatpush1.bf16.msra.mxu0 0
      %1126 = vmatprep.subr.bf16.mxu0 0
      %1127 = vmatpush1.bf16.msra.mxu0 0
      %1128 = vmatprep.subr.bf16.mxu0 0
      %1129 = vmatpush1.bf16.msra.mxu0 0
      %1130 = vmatprep.subr.bf16.mxu0 0
      %1131 = vmatpush1.bf16.msra.mxu0 0
      %1132 = vmatprep.subr.bf16.mxu0 0
      %1133 = vmatpush1.bf16.msra.mxu0 0
      %1134 = vmatprep.subr.bf16.mxu0 0
      %1135 = vmatpush1.bf16.msra.mxu0 0
      %1136 = vmatprep.subr.bf16.mxu0 0
      %1137 = vmatpush1.bf16.msra.mxu0 0
      %1138 = vmatprep.subr.bf16.mxu0 0
      %1139 = vmatpush1.bf16.msra.mxu0 0
      %1140 = vmatprep.subr.bf16.mxu0 0
      %1141 = vmatpush1.bf16.msra.mxu0 0
      %1142 = vmatprep.mubr.bf16.mxu0 0
      %1143 = vmatmul.mubr.bf16.gmra.mrb[0].mxu0 %v1108
      %v1144 = vpop.f32.mrb[0].mxu0
      %v1145 = vadd.f32 0.0, %v1144
      %v1146 = vpop.f32.mrb[0].mxu0
      %v1147 = vpop.f32.mrb[0].mxu0
      %v1148 = vpop.f32.mrb[0].mxu0
      %1149 = vdwg.mxu0
      %v1152 = vunpack.c.l.b16 %v897
      %v1153 = vunpack.c.l.b16 %v898
      %v1154 = vpack.c.b16 %v1153, %v1152
      %v1157 = vsel %vm959, %v861, 0
      %1159 = vmatprep.subr.bf16.mxu0 0
      %1160 = vmatpush1.bf16.msra.mxu0 %v1154
      %1161 = vmatprep.subr.bf16.mxu0 0
      %1162 = vmatpush1.bf16.msra.mxu0 0
      %1163 = vmatprep.subr.bf16.mxu0 0
      %1164 = vmatpush1.bf16.msra.mxu0 0
      %1165 = vmatprep.subr.bf16.mxu0 0
      %1166 = vmatpush1.bf16.msra.mxu0 0
      %1167 = vmatprep.subr.bf16.mxu0 0
      %1168 = vmatpush1.bf16.msra.mxu0 0
      %1169 = vmatprep.subr.bf16.mxu0 0
      %1170 = vmatpush1.bf16.msra.mxu0 0
      %1171 = vmatprep.subr.bf16.mxu0 0
      %1172 = vmatpush1.bf16.msra.mxu0 0
      %1173 = vmatprep.subr.bf16.mxu0 0
      %1174 = vmatpush1.bf16.msra.mxu0 0
      %1175 = vmatprep.subr.bf16.mxu0 0
      %1176 = vmatpush1.bf16.msra.mxu0 0
      %1177 = vmatprep.subr.bf16.mxu0 0
      %1178 = vmatpush1.bf16.msra.mxu0 0
      %1179 = vmatprep.subr.bf16.mxu0 0
      %1180 = vmatpush1.bf16.msra.mxu0 0
      %1181 = vmatprep.subr.bf16.mxu0 0
      %1182 = vmatpush1.bf16.msra.mxu0 0
      %1183 = vmatprep.subr.bf16.mxu0 0
      %1184 = vmatpush1.bf16.msra.mxu0 0
      %1185 = vmatprep.subr.bf16.mxu0 0
      %1186 = vmatpush1.bf16.msra.mxu0 0
      %1187 = vmatprep.subr.bf16.mxu0 0
      %1188 = vmatpush1.bf16.msra.mxu0 0
      %1189 = vmatprep.subr.bf16.mxu0 0
      %1190 = vmatpush1.bf16.msra.mxu0 0
      %1191 = vmatprep.mubr.bf16.mxu0 0
      %1192 = vmatmul.mubr.bf16.gmra.mrb[0].mxu0 %v1157
      %v1193 = vpop.f32.mrb[0].mxu0
      %v1194 = vadd.f32 0.0, %v1193
      %v1195 = vpop.f32.mrb[0].mxu0
      %v1196 = vpop.f32.mrb[0].mxu0
      %v1197 = vpop.f32.mrb[0].mxu0
      %1198 = vdwg.mxu0
      %v1201 = vunpack.c.l.b16 %v899
      %v1202 = vunpack.c.l.b16 %v900
      %v1203 = vpack.c.b16 %v1202, %v1201
      %v1206 = vsel %vm959, %v862, 0
      %1208 = vmatprep.subr.bf16.mxu0 0
      %1209 = vmatpush1.bf16.msra.mxu0 %v1203
      %1210 = vmatprep.subr.bf16.mxu0 0
      %1211 = vmatpush1.bf16.msra.mxu0 0
      %1212 = vmatprep.subr.bf16.mxu0 0
      %1213 = vmatpush1.bf16.msra.mxu0 0
      %1214 = vmatprep.subr.bf16.mxu0 0
      %1215 = vmatpush1.bf16.msra.mxu0 0
      %1216 = vmatprep.subr.bf16.mxu0 0
      %1217 = vmatpush1.bf16.msra.mxu0 0
      %1218 = vmatprep.subr.bf16.mxu0 0
      %1219 = vmatpush1.bf16.msra.mxu0 0
      %1220 = vmatprep.subr.bf16.mxu0 0
      %1221 = vmatpush1.bf16.msra.mxu0 0
      %1222 = vmatprep.subr.bf16.mxu0 0
      %1223 = vmatpush1.bf16.msra.mxu0 0
      %1224 = vmatprep.subr.bf16.mxu0 0
      %1225 = vmatpush1.bf16.msra.mxu0 0
      %1226 = vmatprep.subr.bf16.mxu0 0
      %1227 = vmatpush1.bf16.msra.mxu0 0
      %1228 = vmatprep.subr.bf16.mxu0 0
      %1229 = vmatpush1.bf16.msra.mxu0 0
      %1230 = vmatprep.subr.bf16.mxu0 0
      %1231 = vmatpush1.bf16.msra.mxu0 0
      %1232 = vmatprep.subr.bf16.mxu0 0
      %1233 = vmatpush1.bf16.msra.mxu0 0
      %1234 = vmatprep.subr.bf16.mxu0 0
      %1235 = vmatpush1.bf16.msra.mxu0 0
      %1236 = vmatprep.subr.bf16.mxu0 0
      %1237 = vmatpush1.bf16.msra.mxu0 0
      %1238 = vmatprep.subr.bf16.mxu0 0
      %1239 = vmatpush1.bf16.msra.mxu0 0
      %1240 = vmatprep.mubr.bf16.mxu0 0
      %1241 = vmatmul.mubr.bf16.gmra.mrb[0].mxu0 %v1206
      %v1242 = vpop.f32.mrb[0].mxu0
      %v1243 = vadd.f32 0.0, %v1242
      %v1244 = vpop.f32.mrb[0].mxu0
      %v1245 = vpop.f32.mrb[0].mxu0
      %v1246 = vpop.f32.mrb[0].mxu0
      %1247 = vdwg.mxu0
      %v1250 = vunpack.c.l.b16 %v901
      %v1251 = vunpack.c.l.b16 %v902
      %v1252 = vpack.c.b16 %v1251, %v1250
      %v1255 = vsel %vm959, %v863, 0
      %1257 = vmatprep.subr.bf16.mxu0 0
      %1258 = vmatpush1.bf16.msra.mxu0 %v1252
      %1259 = vmatprep.subr.bf16.mxu0 0
      %1260 = vmatpush1.bf16.msra.mxu0 0
      %1261 = vmatprep.subr.bf16.mxu0 0
      %1262 = vmatpush1.bf16.msra.mxu0 0
      %1263 = vmatprep.subr.bf16.mxu0 0
      %1264 = vmatpush1.bf16.msra.mxu0 0
      %1265 = vmatprep.subr.bf16.mxu0 0
      %1266 = vmatpush1.bf16.msra.mxu0 0
      %1267 = vmatprep.subr.bf16.mxu0 0
      %1268 = vmatpush1.bf16.msra.mxu0 0
      %1269 = vmatprep.subr.bf16.mxu0 0
      %1270 = vmatpush1.bf16.msra.mxu0 0
      %1271 = vmatprep.subr.bf16.mxu0 0
      %1272 = vmatpush1.bf16.msra.mxu0 0
      %1273 = vmatprep.subr.bf16.mxu0 0
      %1274 = vmatpush1.bf16.msra.mxu0 0
      %1275 = vmatprep.subr.bf16.mxu0 0
      %1276 = vmatpush1.bf16.msra.mxu0 0
      %1277 = vmatprep.subr.bf16.mxu0 0
      %1278 = vmatpush1.bf16.msra.mxu0 0
      %1279 = vmatprep.subr.bf16.mxu0 0
      %1280 = vmatpush1.bf16.msra.mxu0 0
      %1281 = vmatprep.subr.bf16.mxu0 0
      %1282 = vmatpush1.bf16.msra.mxu0 0
      %1283 = vmatprep.subr.bf16.mxu0 0
      %1284 = vmatpush1.bf16.msra.mxu0 0
      %1285 = vmatprep.subr.bf16.mxu0 0
      %1286 = vmatpush1.bf16.msra.mxu0 0
      %1287 = vmatprep.subr.bf16.mxu0 0
      %1288 = vmatpush1.bf16.msra.mxu0 0
      %1289 = vmatprep.mubr.bf16.mxu0 0
      %1290 = vmatmul.mubr.bf16.gmra.mrb[0].mxu0 %v1255
      %v1291 = vpop.f32.mrb[0].mxu0
      %v1292 = vadd.f32 0.0, %v1291
      %v1293 = vpop.f32.mrb[0].mxu0
      %v1294 = vpop.f32.mrb[0].mxu0
      %v1295 = vpop.f32.mrb[0].mxu0
      %1296 = vdwg.mxu0
      %v1299 = vunpack.c.l.b16 %v903
      %v1300 = vunpack.c.l.b16 %v904
      %v1301 = vpack.c.b16 %v1300, %v1299
      %v1304 = vsel %vm959, %v864, 0
      %1306 = vmatprep.subr.bf16.mxu0 0
      %1307 = vmatpush1.bf16.msra.mxu0 %v1301
      %1308 = vmatprep.subr.bf16.mxu0 0
      %1309 = vmatpush1.bf16.msra.mxu0 0
      %1310 = vmatprep.subr.bf16.mxu0 0
      %1311 = vmatpush1.bf16.msra.mxu0 0
      %1312 = vmatprep.subr.bf16.mxu0 0
      %1313 = vmatpush1.bf16.msra.mxu0 0
      %1314 = vmatprep.subr.bf16.mxu0 0
      %1315 = vmatpush1.bf16.msra.mxu0 0
      %1316 = vmatprep.subr.bf16.mxu0 0
      %1317 = vmatpush1.bf16.msra.mxu0 0
      %1318 = vmatprep.subr.bf16.mxu0 0
      %1319 = vmatpush1.bf16.msra.mxu0 0
      %1320 = vmatprep.subr.bf16.mxu0 0
      %1321 = vmatpush1.bf16.msra.mxu0 0
      %1322 = vmatprep.subr.bf16.mxu0 0
      %1323 = vmatpush1.bf16.msra.mxu0 0
      %1324 = vmatprep.subr.bf16.mxu0 0
      %1325 = vmatpush1.bf16.msra.mxu0 0
      %1326 = vmatprep.subr.bf16.mxu0 0
      %1327 = vmatpush1.bf16.msra.mxu0 0
      %1328 = vmatprep.subr.bf16.mxu0 0
      %1329 = vmatpush1.bf16.msra.mxu0 0
      %1330 = vmatprep.subr.bf16.mxu0 0
      %1331 = vmatpush1.bf16.msra.mxu0 0
      %1332 = vmatprep.subr.bf16.mxu0 0
      %1333 = vmatpush1.bf16.msra.mxu0 0
      %1334 = vmatprep.subr.bf16.mxu0 0
      %1335 = vmatpush1.bf16.msra.mxu0 0
      %1336 = vmatprep.subr.bf16.mxu0 0
      %1337 = vmatpush1.bf16.msra.mxu0 0
      %1338 = vmatprep.mubr.bf16.mxu0 0
      %1339 = vmatmul.mubr.bf16.gmra.mrb[0].mxu0 %v1304
      %v1340 = vpop.f32.mrb[0].mxu0
      %v1341 = vadd.f32 0.0, %v1340
      %v1342 = vpop.f32.mrb[0].mxu0
      %v1343 = vpop.f32.mrb[0].mxu0
      %v1344 = vpop.f32.mrb[0].mxu0
      %1345 = vdwg.mxu0
      %v1348 = vunpack.c.l.b16 %v905
      %v1349 = vunpack.c.l.b16 %v906
      %v1350 = vpack.c.b16 %v1349, %v1348
      %v1353 = vsel %vm959, %v865, 0
      %1355 = vmatprep.subr.bf16.mxu0 0
      %1356 = vmatpush1.bf16.msra.mxu0 %v1350
      %1357 = vmatprep.subr.bf16.mxu0 0
      %1358 = vmatpush1.bf16.msra.mxu0 0
      %1359 = vmatprep.subr.bf16.mxu0 0
      %1360 = vmatpush1.bf16.msra.mxu0 0
      %1361 = vmatprep.subr.bf16.mxu0 0
      %1362 = vmatpush1.bf16.msra.mxu0 0
      %1363 = vmatprep.subr.bf16.mxu0 0
      %1364 = vmatpush1.bf16.msra.mxu0 0
      %1365 = vmatprep.subr.bf16.mxu0 0
      %1366 = vmatpush1.bf16.msra.mxu0 0
      %1367 = vmatprep.subr.bf16.mxu0 0
      %1368 = vmatpush1.bf16.msra.mxu0 0
      %1369 = vmatprep.subr.bf16.mxu0 0
      %1370 = vmatpush1.bf16.msra.mxu0 0
      %1371 = vmatprep.subr.bf16.mxu0 0
      %1372 = vmatpush1.bf16.msra.mxu0 0
      %1373 = vmatprep.subr.bf16.mxu0 0
      %1374 = vmatpush1.bf16.msra.mxu0 0
      %1375 = vmatprep.subr.bf16.mxu0 0
      %1376 = vmatpush1.bf16.msra.mxu0 0
      %1377 = vmatprep.subr.bf16.mxu0 0
      %1378 = vmatpush1.bf16.msra.mxu0 0
      %1379 = vmatprep.subr.bf16.mxu0 0
      %1380 = vmatpush1.bf16.msra.mxu0 0
      %1381 = vmatprep.subr.bf16.mxu0 0
      %1382 = vmatpush1.bf16.msra.mxu0 0
      %1383 = vmatprep.subr.bf16.mxu0 0
      %1384 = vmatpush1.bf16.msra.mxu0 0
      %1385 = vmatprep.subr.bf16.mxu0 0
      %1386 = vmatpush1.bf16.msra.mxu0 0
      %1387 = vmatprep.mubr.bf16.mxu0 0
      %1388 = vmatmul.mubr.bf16.gmra.mrb[0].mxu0 %v1353
      %v1389 = vpop.f32.mrb[0].mxu0
      %v1390 = vadd.f32 0.0, %v1389
      %v1391 = vpop.f32.mrb[0].mxu0
      %v1392 = vpop.f32.mrb[0].mxu0
      %v1393 = vpop.f32.mrb[0].mxu0
      %1394 = vdwg.mxu0
      %v1397 = vunpack.c.l.b16 %v907
      %v1398 = vunpack.c.l.b16 %v908
      %v1399 = vpack.c.b16 %v1398, %v1397
      %v1402 = vsel %vm959, %v866, 0
      %1404 = vmatprep.subr.bf16.mxu0 0
      %1405 = vmatpush1.bf16.msra.mxu0 %v1399
      %1406 = vmatprep.subr.bf16.mxu0 0
      %1407 = vmatpush1.bf16.msra.mxu0 0
      %1408 = vmatprep.subr.bf16.mxu0 0
      %1409 = vmatpush1.bf16.msra.mxu0 0
      %1410 = vmatprep.subr.bf16.mxu0 0
      %1411 = vmatpush1.bf16.msra.mxu0 0
      %1412 = vmatprep.subr.bf16.mxu0 0
      %1413 = vmatpush1.bf16.msra.mxu0 0
      %1414 = vmatprep.subr.bf16.mxu0 0
      %1415 = vmatpush1.bf16.msra.mxu0 0
      %1416 = vmatprep.subr.bf16.mxu0 0
      %1417 = vmatpush1.bf16.msra.mxu0 0
      %1418 = vmatprep.subr.bf16.mxu0 0
      %1419 = vmatpush1.bf16.msra.mxu0 0
      %1420 = vmatprep.subr.bf16.mxu0 0
      %1421 = vmatpush1.bf16.msra.mxu0 0
      %1422 = vmatprep.subr.bf16.mxu0 0
      %1423 = vmatpush1.bf16.msra.mxu0 0
      %1424 = vmatprep.subr.bf16.mxu0 0
      %1425 = vmatpush1.bf16.msra.mxu0 0
      %1426 = vmatprep.subr.bf16.mxu0 0
      %1427 = vmatpush1.bf16.msra.mxu0 0
      %1428 = vmatprep.subr.bf16.mxu0 0
      %1429 = vmatpush1.bf16.msra.mxu0 0
      %1430 = vmatprep.subr.bf16.mxu0 0
      %1431 = vmatpush1.bf16.msra.mxu0 0
      %1432 = vmatprep.subr.bf16.mxu0 0
      %1433 = vmatpush1.bf16.msra.mxu0 0
      %1434 = vmatprep.subr.bf16.mxu0 0
      %1435 = vmatpush1.bf16.msra.mxu0 0
      %1436 = vmatprep.mubr.bf16.mxu0 0
      %1437 = vmatmul.mubr.bf16.gmra.mrb[0].mxu0 %v1402
      %v1438 = vpop.f32.mrb[0].mxu0
      %v1439 = vadd.f32 0.0, %v1438
      %v1440 = vpop.f32.mrb[0].mxu0
      %v1441 = vpop.f32.mrb[0].mxu0
      %v1442 = vpop.f32.mrb[0].mxu0
      %1443 = vdwg.mxu0
      %v1446 = vunpack.c.l.b16 %v909
      %v1447 = vunpack.c.l.b16 %v910
      %v1448 = vpack.c.b16 %v1447, %v1446
      %v1451 = vsel %vm959, %v867, 0
      %1453 = vmatprep.subr.bf16.mxu0 0
      %1454 = vmatpush1.bf16.msra.mxu0 %v1448
      %1455 = vmatprep.subr.bf16.mxu0 0
      %1456 = vmatpush1.bf16.msra.mxu0 0
      %1457 = vmatprep.subr.bf16.mxu0 0
      %1458 = vmatpush1.bf16.msra.mxu0 0
      %1459 = vmatprep.subr.bf16.mxu0 0
      %1460 = vmatpush1.bf16.msra.mxu0 0
      %1461 = vmatprep.subr.bf16.mxu0 0
      %1462 = vmatpush1.bf16.msra.mxu0 0
      %1463 = vmatprep.subr.bf16.mxu0 0
      %1464 = vmatpush1.bf16.msra.mxu0 0
      %1465 = vmatprep.subr.bf16.mxu0 0
      %1466 = vmatpush1.bf16.msra.mxu0 0
      %1467 = vmatprep.subr.bf16.mxu0 0
      %1468 = vmatpush1.bf16.msra.mxu0 0
      %1469 = vmatprep.subr.bf16.mxu0 0
      %1470 = vmatpush1.bf16.msra.mxu0 0
      %1471 = vmatprep.subr.bf16.mxu0 0
      %1472 = vmatpush1.bf16.msra.mxu0 0
      %1473 = vmatprep.subr.bf16.mxu0 0
      %1474 = vmatpush1.bf16.msra.mxu0 0
      %1475 = vmatprep.subr.bf16.mxu0 0
      %1476 = vmatpush1.bf16.msra.mxu0 0
      %1477 = vmatprep.subr.bf16.mxu0 0
      %1478 = vmatpush1.bf16.msra.mxu0 0
      %1479 = vmatprep.subr.bf16.mxu0 0
      %1480 = vmatpush1.bf16.msra.mxu0 0
      %1481 = vmatprep.subr.bf16.mxu0 0
      %1482 = vmatpush1.bf16.msra.mxu0 0
      %1483 = vmatprep.subr.bf16.mxu0 0
      %1484 = vmatpush1.bf16.msra.mxu0 0
      %1485 = vmatprep.mubr.bf16.mxu0 0
      %1486 = vmatmul.mubr.bf16.gmra.mrb[0].mxu0 %v1451
      %v1487 = vpop.f32.mrb[0].mxu0
      %v1488 = vadd.f32 0.0, %v1487
      %v1489 = vpop.f32.mrb[0].mxu0
      %v1490 = vpop.f32.mrb[0].mxu0
      %v1491 = vpop.f32.mrb[0].mxu0
      %1492 = vdwg.mxu0
      %v1495 = vunpack.c.l.b16 %v911
      %v1496 = vunpack.c.l.b16 %v912
      %v1497 = vpack.c.b16 %v1496, %v1495
      %v1500 = vsel %vm959, %v868, 0
      %1502 = vmatprep.subr.bf16.mxu0 0
      %1503 = vmatpush1.bf16.msra.mxu0 %v1497
      %1504 = vmatprep.subr.bf16.mxu0 0
      %1505 = vmatpush1.bf16.msra.mxu0 0
      %1506 = vmatprep.subr.bf16.mxu0 0
      %1507 = vmatpush1.bf16.msra.mxu0 0
      %1508 = vmatprep.subr.bf16.mxu0 0
      %1509 = vmatpush1.bf16.msra.mxu0 0
      %1510 = vmatprep.subr.bf16.mxu0 0
      %1511 = vmatpush1.bf16.msra.mxu0 0
      %1512 = vmatprep.subr.bf16.mxu0 0
      %1513 = vmatpush1.bf16.msra.mxu0 0
      %1514 = vmatprep.subr.bf16.mxu0 0
      %1515 = vmatpush1.bf16.msra.mxu0 0
      %1516 = vmatprep.subr.bf16.mxu0 0
      %1517 = vmatpush1.bf16.msra.mxu0 0
      %1518 = vmatprep.subr.bf16.mxu0 0
      %1519 = vmatpush1.bf16.msra.mxu0 0
      %1520 = vmatprep.subr.bf16.mxu0 0
      %1521 = vmatpush1.bf16.msra.mxu0 0
      %1522 = vmatprep.subr.bf16.mxu0 0
      %1523 = vmatpush1.bf16.msra.mxu0 0
      %1524 = vmatprep.subr.bf16.mxu0 0
      %1525 = vmatpush1.bf16.msra.mxu0 0
      %1526 = vmatprep.subr.bf16.mxu0 0
      %1527 = vmatpush1.bf16.msra.mxu0 0
      %1528 = vmatprep.subr.bf16.mxu0 0
      %1529 = vmatpush1.bf16.msra.mxu0 0
      %1530 = vmatprep.subr.bf16.mxu0 0
      %1531 = vmatpush1.bf16.msra.mxu0 0
      %1532 = vmatprep.subr.bf16.mxu0 0
      %1533 = vmatpush1.bf16.msra.mxu0 0
      %1534 = vmatprep.mubr.bf16.mxu0 0
      %1535 = vmatmul.mubr.bf16.gmra.mrb[0].mxu0 %v1500
      %v1536 = vpop.f32.mrb[0].mxu0
      %v1537 = vadd.f32 0.0, %v1536
      %v1538 = vpop.f32.mrb[0].mxu0
      %v1539 = vpop.f32.mrb[0].mxu0
      %v1540 = vpop.f32.mrb[0].mxu0
      %1541 = vdwg.mxu0
      %v1544 = vunpack.c.l.b16 %v913
      %v1545 = vunpack.c.l.b16 %v914
      %v1546 = vpack.c.b16 %v1545, %v1544
      %v1549 = vsel %vm959, %v869, 0
      %1551 = vmatprep.subr.bf16.mxu0 0
      %1552 = vmatpush1.bf16.msra.mxu0 %v1546
      %1553 = vmatprep.subr.bf16.mxu0 0
      %1554 = vmatpush1.bf16.msra.mxu0 0
      %1555 = vmatprep.subr.bf16.mxu0 0
      %1556 = vmatpush1.bf16.msra.mxu0 0
      %1557 = vmatprep.subr.bf16.mxu0 0
      %1558 = vmatpush1.bf16.msra.mxu0 0
      %1559 = vmatprep.subr.bf16.mxu0 0
      %1560 = vmatpush1.bf16.msra.mxu0 0
      %1561 = vmatprep.subr.bf16.mxu0 0
      %1562 = vmatpush1.bf16.msra.mxu0 0
      %1563 = vmatprep.subr.bf16.mxu0 0
      %1564 = vmatpush1.bf16.msra.mxu0 0
      %1565 = vmatprep.subr.bf16.mxu0 0
      %1566 = vmatpush1.bf16.msra.mxu0 0
      %1567 = vmatprep.subr.bf16.mxu0 0
      %1568 = vmatpush1.bf16.msra.mxu0 0
      %1569 = vmatprep.subr.bf16.mxu0 0
      %1570 = vmatpush1.bf16.msra.mxu0 0
      %1571 = vmatprep.subr.bf16.mxu0 0
      %1572 = vmatpush1.bf16.msra.mxu0 0
      %1573 = vmatprep.subr.bf16.mxu0 0
      %1574 = vmatpush1.bf16.msra.mxu0 0
      %1575 = vmatprep.subr.bf16.mxu0 0
      %1576 = vmatpush1.bf16.msra.mxu0 0
      %1577 = vmatprep.subr.bf16.mxu0 0
      %1578 = vmatpush1.bf16.msra.mxu0 0
      %1579 = vmatprep.subr.bf16.mxu0 0
      %1580 = vmatpush1.bf16.msra.mxu0 0
      %1581 = vmatprep.subr.bf16.mxu0 0
      %1582 = vmatpush1.bf16.msra.mxu0 0
      %1583 = vmatprep.mubr.bf16.mxu0 0
      %1584 = vmatmul.mubr.bf16.gmra.mrb[0].mxu0 %v1549
      %v1585 = vpop.f32.mrb[0].mxu0
      %v1586 = vadd.f32 0.0, %v1585
      %v1587 = vpop.f32.mrb[0].mxu0
      %v1588 = vpop.f32.mrb[0].mxu0
      %v1589 = vpop.f32.mrb[0].mxu0
      %1590 = vdwg.mxu0
      %v1593 = vunpack.c.l.b16 %v915
      %v1594 = vunpack.c.l.b16 %v916
      %v1595 = vpack.c.b16 %v1594, %v1593
      %v1598 = vsel %vm959, %v870, 0
      %1600 = vmatprep.subr.bf16.mxu0 0
      %1601 = vmatpush1.bf16.msra.mxu0 %v1595
      %1602 = vmatprep.subr.bf16.mxu0 0
      %1603 = vmatpush1.bf16.msra.mxu0 0
      %1604 = vmatprep.subr.bf16.mxu0 0
      %1605 = vmatpush1.bf16.msra.mxu0 0
      %1606 = vmatprep.subr.bf16.mxu0 0
      %1607 = vmatpush1.bf16.msra.mxu0 0
      %1608 = vmatprep.subr.bf16.mxu0 0
      %1609 = vmatpush1.bf16.msra.mxu0 0
      %1610 = vmatprep.subr.bf16.mxu0 0
      %1611 = vmatpush1.bf16.msra.mxu0 0
      %1612 = vmatprep.subr.bf16.mxu0 0
      %1613 = vmatpush1.bf16.msra.mxu0 0
      %1614 = vmatprep.subr.bf16.mxu0 0
      %1615 = vmatpush1.bf16.msra.mxu0 0
      %1616 = vmatprep.subr.bf16.mxu0 0
      %1617 = vmatpush1.bf16.msra.mxu0 0
      %1618 = vmatprep.subr.bf16.mxu0 0
      %1619 = vmatpush1.bf16.msra.mxu0 0
      %1620 = vmatprep.subr.bf16.mxu0 0
      %1621 = vmatpush1.bf16.msra.mxu0 0
      %1622 = vmatprep.subr.bf16.mxu0 0
      %1623 = vmatpush1.bf16.msra.mxu0 0
      %1624 = vmatprep.subr.bf16.mxu0 0
      %1625 = vmatpush1.bf16.msra.mxu0 0
      %1626 = vmatprep.subr.bf16.mxu0 0
      %1627 = vmatpush1.bf16.msra.mxu0 0
      %1628 = vmatprep.subr.bf16.mxu0 0
      %1629 = vmatpush1.bf16.msra.mxu0 0
      %1630 = vmatprep.subr.bf16.mxu0 0
      %1631 = vmatpush1.bf16.msra.mxu0 0
      %1632 = vmatprep.mubr.bf16.mxu0 0
      %1633 = vmatmul.mubr.bf16.gmra.mrb[0].mxu0 %v1598
      %v1634 = vpop.f32.mrb[0].mxu0
      %v1635 = vadd.f32 0.0, %v1634
      %v1636 = vpop.f32.mrb[0].mxu0
      %v1637 = vpop.f32.mrb[0].mxu0
      %v1638 = vpop.f32.mrb[0].mxu0
      %1639 = vdwg.mxu0
      %v1642 = vunpack.c.l.b16 %v917
      %v1643 = vunpack.c.l.b16 %v918
      %v1644 = vpack.c.b16 %v1643, %v1642
      %v1647 = vsel %vm959, %v871, 0
      %1649 = vmatprep.subr.bf16.mxu0 0
      %1650 = vmatpush1.bf16.msra.mxu0 %v1644
      %1651 = vmatprep.subr.bf16.mxu0 0
      %1652 = vmatpush1.bf16.msra.mxu0 0
      %1653 = vmatprep.subr.bf16.mxu0 0
      %1654 = vmatpush1.bf16.msra.mxu0 0
      %1655 = vmatprep.subr.bf16.mxu0 0
      %1656 = vmatpush1.bf16.msra.mxu0 0
      %1657 = vmatprep.subr.bf16.mxu0 0
      %1658 = vmatpush1.bf16.msra.mxu0 0
      %1659 = vmatprep.subr.bf16.mxu0 0
      %1660 = vmatpush1.bf16.msra.mxu0 0
      %1661 = vmatprep.subr.bf16.mxu0 0
      %1662 = vmatpush1.bf16.msra.mxu0 0
      %1663 = vmatprep.subr.bf16.mxu0 0
      %1664 = vmatpush1.bf16.msra.mxu0 0
      %1665 = vmatprep.subr.bf16.mxu0 0
      %1666 = vmatpush1.bf16.msra.mxu0 0
      %1667 = vmatprep.subr.bf16.mxu0 0
      %1668 = vmatpush1.bf16.msra.mxu0 0
      %1669 = vmatprep.subr.bf16.mxu0 0
      %1670 = vmatpush1.bf16.msra.mxu0 0
      %1671 = vmatprep.subr.bf16.mxu0 0
      %1672 = vmatpush1.bf16.msra.mxu0 0
      %1673 = vmatprep.subr.bf16.mxu0 0
      %1674 = vmatpush1.bf16.msra.mxu0 0
      %1675 = vmatprep.subr.bf16.mxu0 0
      %1676 = vmatpush1.bf16.msra.mxu0 0
      %1677 = vmatprep.subr.bf16.mxu0 0
      %1678 = vmatpush1.bf16.msra.mxu0 0
      %1679 = vmatprep.subr.bf16.mxu0 0
      %1680 = vmatpush1.bf16.msra.mxu0 0
      %1681 = vmatprep.mubr.bf16.mxu0 0
      %1682 = vmatmul.mubr.bf16.gmra.mrb[0].mxu0 %v1647
      %v1683 = vpop.f32.mrb[0].mxu0
      %v1684 = vadd.f32 0.0, %v1683
      %v1685 = vpop.f32.mrb[0].mxu0
      %v1686 = vpop.f32.mrb[0].mxu0
      %v1687 = vpop.f32.mrb[0].mxu0
      %1688 = vdwg.mxu0
      %v1691 = vunpack.c.l.b16 %v919
      %v1692 = vunpack.c.l.b16 %v920
      %v1693 = vpack.c.b16 %v1692, %v1691
      %v1696 = vsel %vm959, %v872, 0
      %1698 = vmatprep.subr.bf16.mxu0 0
      %1699 = vmatpush1.bf16.msra.mxu0 %v1693
      %1700 = vmatprep.subr.bf16.mxu0 0
      %1701 = vmatpush1.bf16.msra.mxu0 0
      %1702 = vmatprep.subr.bf16.mxu0 0
      %1703 = vmatpush1.bf16.msra.mxu0 0
      %1704 = vmatprep.subr.bf16.mxu0 0
      %1705 = vmatpush1.bf16.msra.mxu0 0
      %1706 = vmatprep.subr.bf16.mxu0 0
      %1707 = vmatpush1.bf16.msra.mxu0 0
      %1708 = vmatprep.subr.bf16.mxu0 0
      %1709 = vmatpush1.bf16.msra.mxu0 0
      %1710 = vmatprep.subr.bf16.mxu0 0
      %1711 = vmatpush1.bf16.msra.mxu0 0
      %1712 = vmatprep.subr.bf16.mxu0 0
      %1713 = vmatpush1.bf16.msra.mxu0 0
      %1714 = vmatprep.subr.bf16.mxu0 0
      %1715 = vmatpush1.bf16.msra.mxu0 0
      %1716 = vmatprep.subr.bf16.mxu0 0
      %1717 = vmatpush1.bf16.msra.mxu0 0
      %1718 = vmatprep.subr.bf16.mxu0 0
      %1719 = vmatpush1.bf16.msra.mxu0 0
      %1720 = vmatprep.subr.bf16.mxu0 0
      %1721 = vmatpush1.bf16.msra.mxu0 0
      %1722 = vmatprep.subr.bf16.mxu0 0
      %1723 = vmatpush1.bf16.msra.mxu0 0
      %1724 = vmatprep.subr.bf16.mxu0 0
      %1725 = vmatpush1.bf16.msra.mxu0 0
      %1726 = vmatprep.subr.bf16.mxu0 0
      %1727 = vmatpush1.bf16.msra.mxu0 0
      %1728 = vmatprep.subr.bf16.mxu0 0
      %1729 = vmatpush1.bf16.msra.mxu0 0
      %1730 = vmatprep.mubr.bf16.mxu0 0
      %1731 = vmatmul.mubr.bf16.gmra.mrb[0].mxu0 %v1696
      %v1732 = vpop.f32.mrb[0].mxu0
      %v1733 = vadd.f32 0.0, %v1732
      %v1734 = vpop.f32.mrb[0].mxu0
      %v1735 = vpop.f32.mrb[0].mxu0
      %v1736 = vpop.f32.mrb[0].mxu0
      %1737 = vdwg.mxu0
      %v1740 = vunpack.c.l.b16 %v921
      %v1741 = vunpack.c.l.b16 %v922
      %v1742 = vpack.c.b16 %v1741, %v1740
      %v1745 = vsel %vm959, %v873, 0
      %1747 = vmatprep.subr.bf16.mxu0 0
      %1748 = vmatpush1.bf16.msra.mxu0 %v1742
      %1749 = vmatprep.subr.bf16.mxu0 0
      %1750 = vmatpush1.bf16.msra.mxu0 0
      %1751 = vmatprep.subr.bf16.mxu0 0
      %1752 = vmatpush1.bf16.msra.mxu0 0
      %1753 = vmatprep.subr.bf16.mxu0 0
      %1754 = vmatpush1.bf16.msra.mxu0 0
      %1755 = vmatprep.subr.bf16.mxu0 0
      %1756 = vmatpush1.bf16.msra.mxu0 0
      %1757 = vmatprep.subr.bf16.mxu0 0
      %1758 = vmatpush1.bf16.msra.mxu0 0
      %1759 = vmatprep.subr.bf16.mxu0 0
      %1760 = vmatpush1.bf16.msra.mxu0 0
      %1761 = vmatprep.subr.bf16.mxu0 0
      %1762 = vmatpush1.bf16.msra.mxu0 0
      %1763 = vmatprep.subr.bf16.mxu0 0
      %1764 = vmatpush1.bf16.msra.mxu0 0
      %1765 = vmatprep.subr.bf16.mxu0 0
      %1766 = vmatpush1.bf16.msra.mxu0 0
      %1767 = vmatprep.subr.bf16.mxu0 0
      %1768 = vmatpush1.bf16.msra.mxu0 0
      %1769 = vmatprep.subr.bf16.mxu0 0
      %1770 = vmatpush1.bf16.msra.mxu0 0
      %1771 = vmatprep.subr.bf16.mxu0 0
      %1772 = vmatpush1.bf16.msra.mxu0 0
      %1773 = vmatprep.subr.bf16.mxu0 0
      %1774 = vmatpush1.bf16.msra.mxu0 0
      %1775 = vmatprep.subr.bf16.mxu0 0
      %1776 = vmatpush1.bf16.msra.mxu0 0
      %1777 = vmatprep.subr.bf16.mxu0 0
      %1778 = vmatpush1.bf16.msra.mxu0 0
      %1779 = vmatprep.mubr.bf16.mxu0 0
      %1780 = vmatmul.mubr.bf16.gmra.mrb[0].mxu0 %v1745
      %v1781 = vpop.f32.mrb[0].mxu0
      %v1782 = vadd.f32 0.0, %v1781
      %v1783 = vpop.f32.mrb[0].mxu0
      %v1784 = vpop.f32.mrb[0].mxu0
      %v1785 = vpop.f32.mrb[0].mxu0
      %1786 = vdwg.mxu0
      %v1789 = vunpack.c.l.b16 %v923
      %v1790 = vunpack.c.l.b16 %v924
      %v1791 = vpack.c.b16 %v1790, %v1789
      %v1794 = vsel %vm959, %v874, 0
      %1796 = vmatprep.subr.bf16.mxu0 0
      %1797 = vmatpush1.bf16.msra.mxu0 %v1791
      %1798 = vmatprep.subr.bf16.mxu0 0
      %1799 = vmatpush1.bf16.msra.mxu0 0
      %1800 = vmatprep.subr.bf16.mxu0 0
      %1801 = vmatpush1.bf16.msra.mxu0 0
      %1802 = vmatprep.subr.bf16.mxu0 0
      %1803 = vmatpush1.bf16.msra.mxu0 0
      %1804 = vmatprep.subr.bf16.mxu0 0
      %1805 = vmatpush1.bf16.msra.mxu0 0
      %1806 = vmatprep.subr.bf16.mxu0 0
      %1807 = vmatpush1.bf16.msra.mxu0 0
      %1808 = vmatprep.subr.bf16.mxu0 0
      %1809 = vmatpush1.bf16.msra.mxu0 0
      %1810 = vmatprep.subr.bf16.mxu0 0
      %1811 = vmatpush1.bf16.msra.mxu0 0
      %1812 = vmatprep.subr.bf16.mxu0 0
      %1813 = vmatpush1.bf16.msra.mxu0 0
      %1814 = vmatprep.subr.bf16.mxu0 0
      %1815 = vmatpush1.bf16.msra.mxu0 0
      %1816 = vmatprep.subr.bf16.mxu0 0
      %1817 = vmatpush1.bf16.msra.mxu0 0
      %1818 = vmatprep.subr.bf16.mxu0 0
      %1819 = vmatpush1.bf16.msra.mxu0 0
      %1820 = vmatprep.subr.bf16.mxu0 0
      %1821 = vmatpush1.bf16.msra.mxu0 0
      %1822 = vmatprep.subr.bf16.mxu0 0
      %1823 = vmatpush1.bf16.msra.mxu0 0
      %1824 = vmatprep.subr.bf16.mxu0 0
      %1825 = vmatpush1.bf16.msra.mxu0 0
      %1826 = vmatprep.subr.bf16.mxu0 0
      %1827 = vmatpush1.bf16.msra.mxu0 0
      %1828 = vmatprep.mubr.bf16.mxu0 0
      %1829 = vmatmul.mubr.bf16.gmra.mrb[0].mxu0 %v1794
      %v1830 = vpop.f32.mrb[0].mxu0
      %v1831 = vadd.f32 0.0, %v1830
      %v1832 = vpop.f32.mrb[0].mxu0
      %v1833 = vpop.f32.mrb[0].mxu0
      %v1834 = vpop.f32.mrb[0].mxu0
      %1835 = vdwg.mxu0
      %v1838 = vunpack.c.l.b16 %v925
      %v1839 = vunpack.c.l.b16 %v926
      %v1840 = vpack.c.b16 %v1839, %v1838
      %v1843 = vsel %vm959, %v875, 0
      %1845 = vmatprep.subr.bf16.mxu0 0
      %1846 = vmatpush1.bf16.msra.mxu0 %v1840
      %1847 = vmatprep.subr.bf16.mxu0 0
      %1848 = vmatpush1.bf16.msra.mxu0 0
      %1849 = vmatprep.subr.bf16.mxu0 0
      %1850 = vmatpush1.bf16.msra.mxu0 0
      %1851 = vmatprep.subr.bf16.mxu0 0
      %1852 = vmatpush1.bf16.msra.mxu0 0
      %1853 = vmatprep.subr.bf16.mxu0 0
      %1854 = vmatpush1.bf16.msra.mxu0 0
      %1855 = vmatprep.subr.bf16.mxu0 0
      %1856 = vmatpush1.bf16.msra.mxu0 0
      %1857 = vmatprep.subr.bf16.mxu0 0
      %1858 = vmatpush1.bf16.msra.mxu0 0
      %1859 = vmatprep.subr.bf16.mxu0 0
      %1860 = vmatpush1.bf16.msra.mxu0 0
      %1861 = vmatprep.subr.bf16.mxu0 0
      %1862 = vmatpush1.bf16.msra.mxu0 0
      %1863 = vmatprep.subr.bf16.mxu0 0
      %1864 = vmatpush1.bf16.msra.mxu0 0
      %1865 = vmatprep.subr.bf16.mxu0 0
      %1866 = vmatpush1.bf16.msra.mxu0 0
      %1867 = vmatprep.subr.bf16.mxu0 0
      %1868 = vmatpush1.bf16.msra.mxu0 0
      %1869 = vmatprep.subr.bf16.mxu0 0
      %1870 = vmatpush1.bf16.msra.mxu0 0
      %1871 = vmatprep.subr.bf16.mxu0 0
      %1872 = vmatpush1.bf16.msra.mxu0 0
      %1873 = vmatprep.subr.bf16.mxu0 0
      %1874 = vmatpush1.bf16.msra.mxu0 0
      %1875 = vmatprep.subr.bf16.mxu0 0
      %1876 = vmatpush1.bf16.msra.mxu0 0
      %1877 = vmatprep.mubr.bf16.mxu0 0
      %1878 = vmatmul.mubr.bf16.gmra.mrb[0].mxu0 %v1843
      %v1879 = vpop.f32.mrb[0].mxu0
      %v1880 = vadd.f32 0.0, %v1879
      %v1881 = vpop.f32.mrb[0].mxu0
      %v1882 = vpop.f32.mrb[0].mxu0
      %v1883 = vpop.f32.mrb[0].mxu0
      %1884 = vdwg.mxu0
      %v1887 = vunpack.c.l.b16 %v927
      %v1888 = vunpack.c.l.b16 %v928
      %v1889 = vpack.c.b16 %v1888, %v1887
      %v1892 = vsel %vm959, %v876, 0
      %1894 = vmatprep.subr.bf16.mxu0 0
      %1895 = vmatpush1.bf16.msra.mxu0 %v1889
      %1896 = vmatprep.subr.bf16.mxu0 0
      %1897 = vmatpush1.bf16.msra.mxu0 0
      %1898 = vmatprep.subr.bf16.mxu0 0
      %1899 = vmatpush1.bf16.msra.mxu0 0
      %1900 = vmatprep.subr.bf16.mxu0 0
      %1901 = vmatpush1.bf16.msra.mxu0 0
      %1902 = vmatprep.subr.bf16.mxu0 0
      %1903 = vmatpush1.bf16.msra.mxu0 0
      %1904 = vmatprep.subr.bf16.mxu0 0
      %1905 = vmatpush1.bf16.msra.mxu0 0
      %1906 = vmatprep.subr.bf16.mxu0 0
      %1907 = vmatpush1.bf16.msra.mxu0 0
      %1908 = vmatprep.subr.bf16.mxu0 0
      %1909 = vmatpush1.bf16.msra.mxu0 0
      %1910 = vmatprep.subr.bf16.mxu0 0
      %1911 = vmatpush1.bf16.msra.mxu0 0
      %1912 = vmatprep.subr.bf16.mxu0 0
      %1913 = vmatpush1.bf16.msra.mxu0 0
      %1914 = vmatprep.subr.bf16.mxu0 0
      %1915 = vmatpush1.bf16.msra.mxu0 0
      %1916 = vmatprep.subr.bf16.mxu0 0
      %1917 = vmatpush1.bf16.msra.mxu0 0
      %1918 = vmatprep.subr.bf16.mxu0 0
      %1919 = vmatpush1.bf16.msra.mxu0 0
      %1920 = vmatprep.subr.bf16.mxu0 0
      %1921 = vmatpush1.bf16.msra.mxu0 0
      %1922 = vmatprep.subr.bf16.mxu0 0
      %1923 = vmatpush1.bf16.msra.mxu0 0
      %1924 = vmatprep.subr.bf16.mxu0 0
      %1925 = vmatpush1.bf16.msra.mxu0 0
      %1926 = vmatprep.mubr.bf16.mxu0 0
      %1927 = vmatmul.mubr.bf16.gmra.mrb[0].mxu0 %v1892
      %v1928 = vpop.f32.mrb[0].mxu0
      %v1929 = vadd.f32 0.0, %v1928
      %v1930 = vpop.f32.mrb[0].mxu0
      %v1931 = vpop.f32.mrb[0].mxu0
      %v1932 = vpop.f32.mrb[0].mxu0
      %1933 = vdwg.mxu0
      %v1936 = vunpack.c.l.b16 %v929
      %v1937 = vunpack.c.l.b16 %v930
      %v1938 = vpack.c.b16 %v1937, %v1936
      %v1941 = vsel %vm959, %v877, 0
      %1943 = vmatprep.subr.bf16.mxu0 0
      %1944 = vmatpush1.bf16.msra.mxu0 %v1938
      %1945 = vmatprep.subr.bf16.mxu0 0
      %1946 = vmatpush1.bf16.msra.mxu0 0
      %1947 = vmatprep.subr.bf16.mxu0 0
      %1948 = vmatpush1.bf16.msra.mxu0 0
      %1949 = vmatprep.subr.bf16.mxu0 0
      %1950 = vmatpush1.bf16.msra.mxu0 0
      %1951 = vmatprep.subr.bf16.mxu0 0
      %1952 = vmatpush1.bf16.msra.mxu0 0
      %1953 = vmatprep.subr.bf16.mxu0 0
      %1954 = vmatpush1.bf16.msra.mxu0 0
      %1955 = vmatprep.subr.bf16.mxu0 0
      %1956 = vmatpush1.bf16.msra.mxu0 0
      %1957 = vmatprep.subr.bf16.mxu0 0
      %1958 = vmatpush1.bf16.msra.mxu0 0
      %1959 = vmatprep.subr.bf16.mxu0 0
      %1960 = vmatpush1.bf16.msra.mxu0 0
      %1961 = vmatprep.subr.bf16.mxu0 0
      %1962 = vmatpush1.bf16.msra.mxu0 0
      %1963 = vmatprep.subr.bf16.mxu0 0
      %1964 = vmatpush1.bf16.msra.mxu0 0
      %1965 = vmatprep.subr.bf16.mxu0 0
      %1966 = vmatpush1.bf16.msra.mxu0 0
      %1967 = vmatprep.subr.bf16.mxu0 0
      %1968 = vmatpush1.bf16.msra.mxu0 0
      %1969 = vmatprep.subr.bf16.mxu0 0
      %1970 = vmatpush1.bf16.msra.mxu0 0
      %1971 = vmatprep.subr.bf16.mxu0 0
      %1972 = vmatpush1.bf16.msra.mxu0 0
      %1973 = vmatprep.subr.bf16.mxu0 0
      %1974 = vmatpush1.bf16.msra.mxu0 0
      %1975 = vmatprep.mubr.bf16.mxu0 0
      %1976 = vmatmul.mubr.bf16.gmra.mrb[0].mxu0 %v1941
      %v1977 = vpop.f32.mrb[0].mxu0
      %v1978 = vadd.f32 0.0, %v1977
      %v1979 = vpop.f32.mrb[0].mxu0
      %v1980 = vpop.f32.mrb[0].mxu0
      %v1981 = vpop.f32.mrb[0].mxu0
      %1982 = vdwg.mxu0
      %v1985 = vunpack.c.l.b16 %v931
      %v1986 = vunpack.c.l.b16 %v932
      %v1987 = vpack.c.b16 %v1986, %v1985
      %v1990 = vsel %vm959, %v878, 0
      %1992 = vmatprep.subr.bf16.mxu0 0
      %1993 = vmatpush1.bf16.msra.mxu0 %v1987
      %1994 = vmatprep.subr.bf16.mxu0 0
      %1995 = vmatpush1.bf16.msra.mxu0 0
      %1996 = vmatprep.subr.bf16.mxu0 0
      %1997 = vmatpush1.bf16.msra.mxu0 0
      %1998 = vmatprep.subr.bf16.mxu0 0
      %1999 = vmatpush1.bf16.msra.mxu0 0
      %2000 = vmatprep.subr.bf16.mxu0 0
      %2001 = vmatpush1.bf16.msra.mxu0 0
      %2002 = vmatprep.subr.bf16.mxu0 0
      %2003 = vmatpush1.bf16.msra.mxu0 0
      %2004 = vmatprep.subr.bf16.mxu0 0
      %2005 = vmatpush1.bf16.msra.mxu0 0
      %2006 = vmatprep.subr.bf16.mxu0 0
      %2007 = vmatpush1.bf16.msra.mxu0 0
      %2008 = vmatprep.subr.bf16.mxu0 0
      %2009 = vmatpush1.bf16.msra.mxu0 0
      %2010 = vmatprep.subr.bf16.mxu0 0
      %2011 = vmatpush1.bf16.msra.mxu0 0
      %2012 = vmatprep.subr.bf16.mxu0 0
      %2013 = vmatpush1.bf16.msra.mxu0 0
      %2014 = vmatprep.subr.bf16.mxu0 0
      %2015 = vmatpush1.bf16.msra.mxu0 0
      %2016 = vmatprep.subr.bf16.mxu0 0
      %2017 = vmatpush1.bf16.msra.mxu0 0
      %2018 = vmatprep.subr.bf16.mxu0 0
      %2019 = vmatpush1.bf16.msra.mxu0 0
      %2020 = vmatprep.subr.bf16.mxu0 0
      %2021 = vmatpush1.bf16.msra.mxu0 0
      %2022 = vmatprep.subr.bf16.mxu0 0
      %2023 = vmatpush1.bf16.msra.mxu0 0
      %2024 = vmatprep.mubr.bf16.mxu0 0
      %2025 = vmatmul.mubr.bf16.gmra.mrb[0].mxu0 %v1990
      %v2026 = vpop.f32.mrb[0].mxu0
      %v2027 = vadd.f32 0.0, %v2026
      %v2028 = vpop.f32.mrb[0].mxu0
      %v2029 = vpop.f32.mrb[0].mxu0
      %v2030 = vpop.f32.mrb[0].mxu0
      %2031 = vdwg.mxu0
      %v2034 = vunpack.c.l.b16 %v933
      %v2035 = vunpack.c.l.b16 %v934
      %v2036 = vpack.c.b16 %v2035, %v2034
      %v2039 = vsel %vm959, %v879, 0
      %2041 = vmatprep.subr.bf16.mxu0 0
      %2042 = vmatpush1.bf16.msra.mxu0 %v2036
      %2043 = vmatprep.subr.bf16.mxu0 0
      %2044 = vmatpush1.bf16.msra.mxu0 0
      %2045 = vmatprep.subr.bf16.mxu0 0
      %2046 = vmatpush1.bf16.msra.mxu0 0
      %2047 = vmatprep.subr.bf16.mxu0 0
      %2048 = vmatpush1.bf16.msra.mxu0 0
      %2049 = vmatprep.subr.bf16.mxu0 0
      %2050 = vmatpush1.bf16.msra.mxu0 0
      %2051 = vmatprep.subr.bf16.mxu0 0
      %2052 = vmatpush1.bf16.msra.mxu0 0
      %2053 = vmatprep.subr.bf16.mxu0 0
      %2054 = vmatpush1.bf16.msra.mxu0 0
      %2055 = vmatprep.subr.bf16.mxu0 0
      %2056 = vmatpush1.bf16.msra.mxu0 0
      %2057 = vmatprep.subr.bf16.mxu0 0
      %2058 = vmatpush1.bf16.msra.mxu0 0
      %2059 = vmatprep.subr.bf16.mxu0 0
      %2060 = vmatpush1.bf16.msra.mxu0 0
      %2061 = vmatprep.subr.bf16.mxu0 0
      %2062 = vmatpush1.bf16.msra.mxu0 0
      %2063 = vmatprep.subr.bf16.mxu0 0
      %2064 = vmatpush1.bf16.msra.mxu0 0
      %2065 = vmatprep.subr.bf16.mxu0 0
      %2066 = vmatpush1.bf16.msra.mxu0 0
      %2067 = vmatprep.subr.bf16.mxu0 0
      %2068 = vmatpush1.bf16.msra.mxu0 0
      %2069 = vmatprep.subr.bf16.mxu0 0
      %2070 = vmatpush1.bf16.msra.mxu0 0
      %2071 = vmatprep.subr.bf16.mxu0 0
      %2072 = vmatpush1.bf16.msra.mxu0 0
      %2073 = vmatprep.mubr.bf16.mxu0 0
      %2074 = vmatmul.mubr.bf16.gmra.mrb[0].mxu0 %v2039
      %v2075 = vpop.f32.mrb[0].mxu0
      %v2076 = vadd.f32 0.0, %v2075
      %v2077 = vpop.f32.mrb[0].mxu0
      %v2078 = vpop.f32.mrb[0].mxu0
      %v2079 = vpop.f32.mrb[0].mxu0
      %2080 = vdwg.mxu0
      %v2083 = vunpack.c.l.b16 %v935
      %v2084 = vunpack.c.l.b16 %v936
      %v2085 = vpack.c.b16 %v2084, %v2083
      %v2088 = vsel %vm959, %v880, 0
      %2090 = vmatprep.subr.bf16.mxu0 0
      %2091 = vmatpush1.bf16.msra.mxu0 %v2085
      %2092 = vmatprep.subr.bf16.mxu0 0
      %2093 = vmatpush1.bf16.msra.mxu0 0
      %2094 = vmatprep.subr.bf16.mxu0 0
      %2095 = vmatpush1.bf16.msra.mxu0 0
      %2096 = vmatprep.subr.bf16.mxu0 0
      %2097 = vmatpush1.bf16.msra.mxu0 0
      %2098 = vmatprep.subr.bf16.mxu0 0
      %2099 = vmatpush1.bf16.msra.mxu0 0
      %2100 = vmatprep.subr.bf16.mxu0 0
      %2101 = vmatpush1.bf16.msra.mxu0 0
      %2102 = vmatprep.subr.bf16.mxu0 0
      %2103 = vmatpush1.bf16.msra.mxu0 0
      %2104 = vmatprep.subr.bf16.mxu0 0
      %2105 = vmatpush1.bf16.msra.mxu0 0
      %2106 = vmatprep.subr.bf16.mxu0 0
      %2107 = vmatpush1.bf16.msra.mxu0 0
      %2108 = vmatprep.subr.bf16.mxu0 0
      %2109 = vmatpush1.bf16.msra.mxu0 0
      %2110 = vmatprep.subr.bf16.mxu0 0
      %2111 = vmatpush1.bf16.msra.mxu0 0
      %2112 = vmatprep.subr.bf16.mxu0 0
      %2113 = vmatpush1.bf16.msra.mxu0 0
      %2114 = vmatprep.subr.bf16.mxu0 0
      %2115 = vmatpush1.bf16.msra.mxu0 0
      %2116 = vmatprep.subr.bf16.mxu0 0
      %2117 = vmatpush1.bf16.msra.mxu0 0
      %2118 = vmatprep.subr.bf16.mxu0 0
      %2119 = vmatpush1.bf16.msra.mxu0 0
      %2120 = vmatprep.subr.bf16.mxu0 0
      %2121 = vmatpush1.bf16.msra.mxu0 0
      %2122 = vmatprep.mubr.bf16.mxu0 0
      %2123 = vmatmul.mubr.bf16.gmra.mrb[0].mxu0 %v2088
      %v2124 = vpop.f32.mrb[0].mxu0
      %v2125 = vadd.f32 0.0, %v2124
      %v2126 = vpop.f32.mrb[0].mxu0
      %v2127 = vpop.f32.mrb[0].mxu0
      %v2128 = vpop.f32.mrb[0].mxu0
      %2129 = vdwg.mxu0
      %v2132 = vunpack.c.l.b16 %v937
      %v2133 = vunpack.c.l.b16 %v938
      %v2134 = vpack.c.b16 %v2133, %v2132
      %v2137 = vsel %vm959, %v881, 0
      %2139 = vmatprep.subr.bf16.mxu0 0
      %2140 = vmatpush1.bf16.msra.mxu0 %v2134
      %2141 = vmatprep.subr.bf16.mxu0 0
      %2142 = vmatpush1.bf16.msra.mxu0 0
      %2143 = vmatprep.subr.bf16.mxu0 0
      %2144 = vmatpush1.bf16.msra.mxu0 0
      %2145 = vmatprep.subr.bf16.mxu0 0
      %2146 = vmatpush1.bf16.msra.mxu0 0
      %2147 = vmatprep.subr.bf16.mxu0 0
      %2148 = vmatpush1.bf16.msra.mxu0 0
      %2149 = vmatprep.subr.bf16.mxu0 0
      %2150 = vmatpush1.bf16.msra.mxu0 0
      %2151 = vmatprep.subr.bf16.mxu0 0
      %2152 = vmatpush1.bf16.msra.mxu0 0
      %2153 = vmatprep.subr.bf16.mxu0 0
      %2154 = vmatpush1.bf16.msra.mxu0 0
      %2155 = vmatprep.subr.bf16.mxu0 0
      %2156 = vmatpush1.bf16.msra.mxu0 0
      %2157 = vmatprep.subr.bf16.mxu0 0
      %2158 = vmatpush1.bf16.msra.mxu0 0
      %2159 = vmatprep.subr.bf16.mxu0 0
      %2160 = vmatpush1.bf16.msra.mxu0 0
      %2161 = vmatprep.subr.bf16.mxu0 0
      %2162 = vmatpush1.bf16.msra.mxu0 0
      %2163 = vmatprep.subr.bf16.mxu0 0
      %2164 = vmatpush1.bf16.msra.mxu0 0
      %2165 = vmatprep.subr.bf16.mxu0 0
      %2166 = vmatpush1.bf16.msra.mxu0 0
      %2167 = vmatprep.subr.bf16.mxu0 0
      %2168 = vmatpush1.bf16.msra.mxu0 0
      %2169 = vmatprep.subr.bf16.mxu0 0
      %2170 = vmatpush1.bf16.msra.mxu0 0
      %2171 = vmatprep.mubr.bf16.mxu0 0
      %2172 = vmatmul.mubr.bf16.gmra.mrb[0].mxu0 %v2137
      %v2173 = vpop.f32.mrb[0].mxu0
      %v2174 = vadd.f32 0.0, %v2173
      %v2175 = vpop.f32.mrb[0].mxu0
      %v2176 = vpop.f32.mrb[0].mxu0
      %v2177 = vpop.f32.mrb[0].mxu0
      %2178 = vdwg.mxu0
      %v2181 = vunpack.c.l.b16 %v939
      %v2182 = vunpack.c.l.b16 %v940
      %v2183 = vpack.c.b16 %v2182, %v2181
      %v2186 = vsel %vm959, %v882, 0
      %2188 = vmatprep.subr.bf16.mxu0 0
      %2189 = vmatpush1.bf16.msra.mxu0 %v2183
      %2190 = vmatprep.subr.bf16.mxu0 0
      %2191 = vmatpush1.bf16.msra.mxu0 0
      %2192 = vmatprep.subr.bf16.mxu0 0
      %2193 = vmatpush1.bf16.msra.mxu0 0
      %2194 = vmatprep.subr.bf16.mxu0 0
      %2195 = vmatpush1.bf16.msra.mxu0 0
      %2196 = vmatprep.subr.bf16.mxu0 0
      %2197 = vmatpush1.bf16.msra.mxu0 0
      %2198 = vmatprep.subr.bf16.mxu0 0
      %2199 = vmatpush1.bf16.msra.mxu0 0
      %2200 = vmatprep.subr.bf16.mxu0 0
      %2201 = vmatpush1.bf16.msra.mxu0 0
      %2202 = vmatprep.subr.bf16.mxu0 0
      %2203 = vmatpush1.bf16.msra.mxu0 0
      %2204 = vmatprep.subr.bf16.mxu0 0
      %2205 = vmatpush1.bf16.msra.mxu0 0
      %2206 = vmatprep.subr.bf16.mxu0 0
      %2207 = vmatpush1.bf16.msra.mxu0 0
      %2208 = vmatprep.subr.bf16.mxu0 0
      %2209 = vmatpush1.bf16.msra.mxu0 0
      %2210 = vmatprep.subr.bf16.mxu0 0
      %2211 = vmatpush1.bf16.msra.mxu0 0
      %2212 = vmatprep.subr.bf16.mxu0 0
      %2213 = vmatpush1.bf16.msra.mxu0 0
      %2214 = vmatprep.subr.bf16.mxu0 0
      %2215 = vmatpush1.bf16.msra.mxu0 0
      %2216 = vmatprep.subr.bf16.mxu0 0
      %2217 = vmatpush1.bf16.msra.mxu0 0
      %2218 = vmatprep.subr.bf16.mxu0 0
      %2219 = vmatpush1.bf16.msra.mxu0 0
      %2220 = vmatprep.mubr.bf16.mxu0 0
      %2221 = vmatmul.mubr.bf16.gmra.mrb[0].mxu0 %v2186
      %v2222 = vpop.f32.mrb[0].mxu0
      %v2223 = vadd.f32 0.0, %v2222
      %v2224 = vpop.f32.mrb[0].mxu0
      %v2225 = vpop.f32.mrb[0].mxu0
      %v2226 = vpop.f32.mrb[0].mxu0
      %2227 = vdwg.mxu0
      %v2230 = vunpack.c.l.b16 %v941
      %v2231 = vunpack.c.l.b16 %v942
      %v2232 = vpack.c.b16 %v2231, %v2230
      %v2235 = vsel %vm959, %v883, 0
      %2237 = vmatprep.subr.bf16.mxu0 0
      %2238 = vmatpush1.bf16.msra.mxu0 %v2232
      %2239 = vmatprep.subr.bf16.mxu0 0
      %2240 = vmatpush1.bf16.msra.mxu0 0
      %2241 = vmatprep.subr.bf16.mxu0 0
      %2242 = vmatpush1.bf16.msra.mxu0 0
      %2243 = vmatprep.subr.bf16.mxu0 0
      %2244 = vmatpush1.bf16.msra.mxu0 0
      %2245 = vmatprep.subr.bf16.mxu0 0
      %2246 = vmatpush1.bf16.msra.mxu0 0
      %2247 = vmatprep.subr.bf16.mxu0 0
      %2248 = vmatpush1.bf16.msra.mxu0 0
      %2249 = vmatprep.subr.bf16.mxu0 0
      %2250 = vmatpush1.bf16.msra.mxu0 0
      %2251 = vmatprep.subr.bf16.mxu0 0
      %2252 = vmatpush1.bf16.msra.mxu0 0
      %2253 = vmatprep.subr.bf16.mxu0 0
      %2254 = vmatpush1.bf16.msra.mxu0 0
      %2255 = vmatprep.subr.bf16.mxu0 0
      %2256 = vmatpush1.bf16.msra.mxu0 0
      %2257 = vmatprep.subr.bf16.mxu0 0
      %2258 = vmatpush1.bf16.msra.mxu0 0
      %2259 = vmatprep.subr.bf16.mxu0 0
      %2260 = vmatpush1.bf16.msra.mxu0 0
      %2261 = vmatprep.subr.bf16.mxu0 0
      %2262 = vmatpush1.bf16.msra.mxu0 0
      %2263 = vmatprep.subr.bf16.mxu0 0
      %2264 = vmatpush1.bf16.msra.mxu0 0
      %2265 = vmatprep.subr.bf16.mxu0 0
      %2266 = vmatpush1.bf16.msra.mxu0 0
      %2267 = vmatprep.subr.bf16.mxu0 0
      %2268 = vmatpush1.bf16.msra.mxu0 0
      %2269 = vmatprep.mubr.bf16.mxu0 0
      %2270 = vmatmul.mubr.bf16.gmra.mrb[0].mxu0 %v2235
      %v2271 = vpop.f32.mrb[0].mxu0
      %v2272 = vadd.f32 0.0, %v2271
      %v2273 = vpop.f32.mrb[0].mxu0
      %v2274 = vpop.f32.mrb[0].mxu0
      %v2275 = vpop.f32.mrb[0].mxu0
      %2276 = vdwg.mxu0
      %v2279 = vunpack.c.l.b16 %v943
      %v2280 = vunpack.c.l.b16 %v944
      %v2281 = vpack.c.b16 %v2280, %v2279
      %v2284 = vsel %vm959, %v884, 0
      %2286 = vmatprep.subr.bf16.mxu0 0
      %2287 = vmatpush1.bf16.msra.mxu0 %v2281
      %2288 = vmatprep.subr.bf16.mxu0 0
      %2289 = vmatpush1.bf16.msra.mxu0 0
      %2290 = vmatprep.subr.bf16.mxu0 0
      %2291 = vmatpush1.bf16.msra.mxu0 0
      %2292 = vmatprep.subr.bf16.mxu0 0
      %2293 = vmatpush1.bf16.msra.mxu0 0
      %2294 = vmatprep.subr.bf16.mxu0 0
      %2295 = vmatpush1.bf16.msra.mxu0 0
      %2296 = vmatprep.subr.bf16.mxu0 0
      %2297 = vmatpush1.bf16.msra.mxu0 0
      %2298 = vmatprep.subr.bf16.mxu0 0
      %2299 = vmatpush1.bf16.msra.mxu0 0
      %2300 = vmatprep.subr.bf16.mxu0 0
      %2301 = vmatpush1.bf16.msra.mxu0 0
      %2302 = vmatprep.subr.bf16.mxu0 0
      %2303 = vmatpush1.bf16.msra.mxu0 0
      %2304 = vmatprep.subr.bf16.mxu0 0
      %2305 = vmatpush1.bf16.msra.mxu0 0
      %2306 = vmatprep.subr.bf16.mxu0 0
      %2307 = vmatpush1.bf16.msra.mxu0 0
      %2308 = vmatprep.subr.bf16.mxu0 0
      %2309 = vmatpush1.bf16.msra.mxu0 0
      %2310 = vmatprep.subr.bf16.mxu0 0
      %2311 = vmatpush1.bf16.msra.mxu0 0
      %2312 = vmatprep.subr.bf16.mxu0 0
      %2313 = vmatpush1.bf16.msra.mxu0 0
      %2314 = vmatprep.subr.bf16.mxu0 0
      %2315 = vmatpush1.bf16.msra.mxu0 0
      %2316 = vmatprep.subr.bf16.mxu0 0
      %2317 = vmatpush1.bf16.msra.mxu0 0
      %2318 = vmatprep.mubr.bf16.mxu0 0
      %2319 = vmatmul.mubr.bf16.gmra.mrb[0].mxu0 %v2284
      %v2320 = vpop.f32.mrb[0].mxu0
      %v2321 = vadd.f32 0.0, %v2320
      %v2322 = vpop.f32.mrb[0].mxu0
      %v2323 = vpop.f32.mrb[0].mxu0
      %v2324 = vpop.f32.mrb[0].mxu0
      %2325 = vdwg.mxu0
      %v2328 = vunpack.c.l.b16 %v945
      %v2329 = vunpack.c.l.b16 %v946
      %v2330 = vpack.c.b16 %v2329, %v2328
      %v2333 = vsel %vm959, %v885, 0
      %2335 = vmatprep.subr.bf16.mxu0 0
      %2336 = vmatpush1.bf16.msra.mxu0 %v2330
      %2337 = vmatprep.subr.bf16.mxu0 0
      %2338 = vmatpush1.bf16.msra.mxu0 0
      %2339 = vmatprep.subr.bf16.mxu0 0
      %2340 = vmatpush1.bf16.msra.mxu0 0
      %2341 = vmatprep.subr.bf16.mxu0 0
      %2342 = vmatpush1.bf16.msra.mxu0 0
      %2343 = vmatprep.subr.bf16.mxu0 0
      %2344 = vmatpush1.bf16.msra.mxu0 0
      %2345 = vmatprep.subr.bf16.mxu0 0
      %2346 = vmatpush1.bf16.msra.mxu0 0
      %2347 = vmatprep.subr.bf16.mxu0 0
      %2348 = vmatpush1.bf16.msra.mxu0 0
      %2349 = vmatprep.subr.bf16.mxu0 0
      %2350 = vmatpush1.bf16.msra.mxu0 0
      %2351 = vmatprep.subr.bf16.mxu0 0
      %2352 = vmatpush1.bf16.msra.mxu0 0
      %2353 = vmatprep.subr.bf16.mxu0 0
      %2354 = vmatpush1.bf16.msra.mxu0 0
      %2355 = vmatprep.subr.bf16.mxu0 0
      %2356 = vmatpush1.bf16.msra.mxu0 0
      %2357 = vmatprep.subr.bf16.mxu0 0
      %2358 = vmatpush1.bf16.msra.mxu0 0
      %2359 = vmatprep.subr.bf16.mxu0 0
      %2360 = vmatpush1.bf16.msra.mxu0 0
      %2361 = vmatprep.subr.bf16.mxu0 0
      %2362 = vmatpush1.bf16.msra.mxu0 0
      %2363 = vmatprep.subr.bf16.mxu0 0
      %2364 = vmatpush1.bf16.msra.mxu0 0
      %2365 = vmatprep.subr.bf16.mxu0 0
      %2366 = vmatpush1.bf16.msra.mxu0 0
      %2367 = vmatprep.mubr.bf16.mxu0 0
      %2368 = vmatmul.mubr.bf16.gmra.mrb[0].mxu0 %v2333
      %v2369 = vpop.f32.mrb[0].mxu0
      %v2370 = vadd.f32 0.0, %v2369
      %v2371 = vpop.f32.mrb[0].mxu0
      %v2372 = vpop.f32.mrb[0].mxu0
      %v2373 = vpop.f32.mrb[0].mxu0
      %2374 = vdwg.mxu0
      %v2377 = vunpack.c.l.b16 %v947
      %v2378 = vunpack.c.l.b16 %v948
      %v2379 = vpack.c.b16 %v2378, %v2377
      %v2382 = vsel %vm959, %v886, 0
      %2384 = vmatprep.subr.bf16.mxu0 0
      %2385 = vmatpush1.bf16.msra.mxu0 %v2379
      %2386 = vmatprep.subr.bf16.mxu0 0
      %2387 = vmatpush1.bf16.msra.mxu0 0
      %2388 = vmatprep.subr.bf16.mxu0 0
      %2389 = vmatpush1.bf16.msra.mxu0 0
      %2390 = vmatprep.subr.bf16.mxu0 0
      %2391 = vmatpush1.bf16.msra.mxu0 0
      %2392 = vmatprep.subr.bf16.mxu0 0
      %2393 = vmatpush1.bf16.msra.mxu0 0
      %2394 = vmatprep.subr.bf16.mxu0 0
      %2395 = vmatpush1.bf16.msra.mxu0 0
      %2396 = vmatprep.subr.bf16.mxu0 0
      %2397 = vmatpush1.bf16.msra.mxu0 0
      %2398 = vmatprep.subr.bf16.mxu0 0
      %2399 = vmatpush1.bf16.msra.mxu0 0
      %2400 = vmatprep.subr.bf16.mxu0 0
      %2401 = vmatpush1.bf16.msra.mxu0 0
      %2402 = vmatprep.subr.bf16.mxu0 0
      %2403 = vmatpush1.bf16.msra.mxu0 0
      %2404 = vmatprep.subr.bf16.mxu0 0
      %2405 = vmatpush1.bf16.msra.mxu0 0
      %2406 = vmatprep.subr.bf16.mxu0 0
      %2407 = vmatpush1.bf16.msra.mxu0 0
      %2408 = vmatprep.subr.bf16.mxu0 0
      %2409 = vmatpush1.bf16.msra.mxu0 0
      %2410 = vmatprep.subr.bf16.mxu0 0
      %2411 = vmatpush1.bf16.msra.mxu0 0
      %2412 = vmatprep.subr.bf16.mxu0 0
      %2413 = vmatpush1.bf16.msra.mxu0 0
      %2414 = vmatprep.subr.bf16.mxu0 0
      %2415 = vmatpush1.bf16.msra.mxu0 0
      %2416 = vmatprep.mubr.bf16.mxu0 0
      %2417 = vmatmul.mubr.bf16.gmra.mrb[0].mxu0 %v2382
      %v2418 = vpop.f32.mrb[0].mxu0
      %v2419 = vadd.f32 0.0, %v2418
      %v2420 = vpop.f32.mrb[0].mxu0
      %v2421 = vpop.f32.mrb[0].mxu0
      %v2422 = vpop.f32.mrb[0].mxu0
      %2423 = vdwg.mxu0
      %v2426 = vunpack.c.l.b16 %v949
      %v2427 = vunpack.c.l.b16 %v950
      %v2428 = vpack.c.b16 %v2427, %v2426
      %v2431 = vsel %vm959, %v887, 0
      %2433 = vmatprep.subr.bf16.mxu0 0
      %2434 = vmatpush1.bf16.msra.mxu0 %v2428
      %2435 = vmatprep.subr.bf16.mxu0 0
      %2436 = vmatpush1.bf16.msra.mxu0 0
      %2437 = vmatprep.subr.bf16.mxu0 0
      %2438 = vmatpush1.bf16.msra.mxu0 0
      %2439 = vmatprep.subr.bf16.mxu0 0
      %2440 = vmatpush1.bf16.msra.mxu0 0
      %2441 = vmatprep.subr.bf16.mxu0 0
      %2442 = vmatpush1.bf16.msra.mxu0 0
      %2443 = vmatprep.subr.bf16.mxu0 0
      %2444 = vmatpush1.bf16.msra.mxu0 0
      %2445 = vmatprep.subr.bf16.mxu0 0
      %2446 = vmatpush1.bf16.msra.mxu0 0
      %2447 = vmatprep.subr.bf16.mxu0 0
      %2448 = vmatpush1.bf16.msra.mxu0 0
      %2449 = vmatprep.subr.bf16.mxu0 0
      %2450 = vmatpush1.bf16.msra.mxu0 0
      %2451 = vmatprep.subr.bf16.mxu0 0
      %2452 = vmatpush1.bf16.msra.mxu0 0
      %2453 = vmatprep.subr.bf16.mxu0 0
      %2454 = vmatpush1.bf16.msra.mxu0 0
      %2455 = vmatprep.subr.bf16.mxu0 0
      %2456 = vmatpush1.bf16.msra.mxu0 0
      %2457 = vmatprep.subr.bf16.mxu0 0
      %2458 = vmatpush1.bf16.msra.mxu0 0
      %2459 = vmatprep.subr.bf16.mxu0 0
      %2460 = vmatpush1.bf16.msra.mxu0 0
      %2461 = vmatprep.subr.bf16.mxu0 0
      %2462 = vmatpush1.bf16.msra.mxu0 0
      %2463 = vmatprep.subr.bf16.mxu0 0
      %2464 = vmatpush1.bf16.msra.mxu0 0
      %2465 = vmatprep.mubr.bf16.mxu0 0
      %2466 = vmatmul.mubr.bf16.gmra.mrb[0].mxu0 %v2431
      %v2467 = vpop.f32.mrb[0].mxu0
      %v2468 = vadd.f32 0.0, %v2467
      %v2469 = vpop.f32.mrb[0].mxu0
      %v2470 = vpop.f32.mrb[0].mxu0
      %v2471 = vpop.f32.mrb[0].mxu0
      %2472 = vdwg.mxu0
      %v2475 = vunpack.c.l.b16 %v951
      %v2476 = vunpack.c.l.b16 %v952
      %v2477 = vpack.c.b16 %v2476, %v2475
      %v2480 = vsel %vm959, %v888, 0
      %2482 = vmatprep.subr.bf16.mxu0 0
      %2483 = vmatpush1.bf16.msra.mxu0 %v2477
      %2484 = vmatprep.subr.bf16.mxu0 0
      %2485 = vmatpush1.bf16.msra.mxu0 0
      %2486 = vmatprep.subr.bf16.mxu0 0
      %2487 = vmatpush1.bf16.msra.mxu0 0
      %2488 = vmatprep.subr.bf16.mxu0 0
      %2489 = vmatpush1.bf16.msra.mxu0 0
      %2490 = vmatprep.subr.bf16.mxu0 0
      %2491 = vmatpush1.bf16.msra.mxu0 0
      %2492 = vmatprep.subr.bf16.mxu0 0
      %2493 = vmatpush1.bf16.msra.mxu0 0
      %2494 = vmatprep.subr.bf16.mxu0 0
      %2495 = vmatpush1.bf16.msra.mxu0 0
      %2496 = vmatprep.subr.bf16.mxu0 0
      %2497 = vmatpush1.bf16.msra.mxu0 0
      %2498 = vmatprep.subr.bf16.mxu0 0
      %2499 = vmatpush1.bf16.msra.mxu0 0
      %2500 = vmatprep.subr.bf16.mxu0 0
      %2501 = vmatpush1.bf16.msra.mxu0 0
      %2502 = vmatprep.subr.bf16.mxu0 0
      %2503 = vmatpush1.bf16.msra.mxu0 0
      %2504 = vmatprep.subr.bf16.mxu0 0
      %2505 = vmatpush1.bf16.msra.mxu0 0
      %2506 = vmatprep.subr.bf16.mxu0 0
      %2507 = vmatpush1.bf16.msra.mxu0 0
      %2508 = vmatprep.subr.bf16.mxu0 0
      %2509 = vmatpush1.bf16.msra.mxu0 0
      %2510 = vmatprep.subr.bf16.mxu0 0
      %2511 = vmatpush1.bf16.msra.mxu0 0
      %2512 = vmatprep.subr.bf16.mxu0 0
      %2513 = vmatpush1.bf16.msra.mxu0 0
      %2514 = vmatprep.mubr.bf16.mxu0 0
      %2515 = vmatmul.mubr.bf16.gmra.mrb[0].mxu0 %v2480
      %v2516 = vpop.f32.mrb[0].mxu0
      %v2517 = vadd.f32 0.0, %v2516
      %v2518 = vpop.f32.mrb[0].mxu0
      %v2519 = vpop.f32.mrb[0].mxu0
      %v2520 = vpop.f32.mrb[0].mxu0
      %2521 = vdwg.mxu0
      %vm2522 = vcmp.gt.s32.totalorder %v335, 1
      %v2523 = vsel %vm2522, %v335, 1
      %vm2524 = vcmp.gt.s32.totalorder %v336, 1
      %v2525 = vsel %vm2524, %v336, 1
      %vm2526 = vcmp.gt.s32.totalorder %v337, 1
      %v2527 = vsel %vm2526, %v337, 1
      %vm2528 = vcmp.gt.s32.totalorder %v338, 1
      %v2529 = vsel %vm2528, %v338, 1
      %v2530 = vcvt.s32.f32 %v2523
      %v2531 = vcvt.s32.f32 %v2525
      %v2532 = vcvt.s32.f32 %v2527
      %v2533 = vcvt.s32.f32 %v2529
      %2535 = vset.pattern.permute.xlu0 0
      %2536 = vperm.xlu0 %2535, %v2530
      %v2537 = vpop.permute.xlu0 %2536
      %2539 = vset.pattern.permute.xlu0 0
      %2540 = vperm.xlu0 %2539, %v2531
      %v2541 = vpop.permute.xlu0 %2540
      %2543 = vset.pattern.permute.xlu0 0
      %2544 = vperm.xlu0 %2543, %v2532
      %v2545 = vpop.permute.xlu0 %2544
      %2547 = vset.pattern.permute.xlu0 0
      %2548 = vperm.xlu0 %2547, %v2533
      %v2549 = vpop.permute.xlu0 %2548
      %v2550 = vrot.slane %v2537, 1
      %v2551 = vrot.slane %v2537, 2
      %v2552 = vrot.slane %v2537, 3
      %v2553 = vrot.slane %v2537, 4
      %v2554 = vrot.slane %v2537, 5
      %v2555 = vrot.slane %v2537, 6
      %v2556 = vrot.slane %v2537, 7
      %v2557 = vrot.slane %v2541, 1
      %v2558 = vrot.slane %v2541, 2
      %v2559 = vrot.slane %v2541, 3
      %v2560 = vrot.slane %v2541, 4
      %v2561 = vrot.slane %v2541, 5
      %v2562 = vrot.slane %v2541, 6
      %v2563 = vrot.slane %v2541, 7
      %v2564 = vrot.slane %v2545, 1
      %v2565 = vrot.slane %v2545, 2
      %v2566 = vrot.slane %v2545, 3
      %v2567 = vrot.slane %v2545, 4
      %v2568 = vrot.slane %v2545, 5
      %v2569 = vrot.slane %v2545, 6
      %v2570 = vrot.slane %v2545, 7
      %v2571 = vrot.slane %v2549, 1
      %v2572 = vrot.slane %v2549, 2
      %v2573 = vrot.slane %v2549, 3
      %v2574 = vrot.slane %v2549, 4
      %v2575 = vrot.slane %v2549, 5
      %v2576 = vrot.slane %v2549, 6
      %v2577 = vrot.slane %v2549, 7
      %v2610 = vrcp.pop %v2537
      %v2611 = vmul.f32 %v998, %v2610
      %v2612 = vrcp.pop %v2550
      %v2613 = vmul.f32 %v1047, %v2612
      %v2614 = vrcp.pop %v2551
      %v2615 = vmul.f32 %v1096, %v2614
      %v2616 = vrcp.pop %v2552
      %v2617 = vmul.f32 %v1145, %v2616
      %v2618 = vrcp.pop %v2553
      %v2619 = vmul.f32 %v1194, %v2618
      %v2620 = vrcp.pop %v2554
      %v2621 = vmul.f32 %v1243, %v2620
      %v2622 = vrcp.pop %v2555
      %v2623 = vmul.f32 %v1292, %v2622
      %v2624 = vrcp.pop %v2556
      %v2625 = vmul.f32 %v1341, %v2624
      %v2626 = vrcp.pop %v2541
      %v2627 = vmul.f32 %v1390, %v2626
      %v2628 = vrcp.pop %v2557
      %v2629 = vmul.f32 %v1439, %v2628
      %v2630 = vrcp.pop %v2558
      %v2631 = vmul.f32 %v1488, %v2630
      %v2632 = vrcp.pop %v2559
      %v2633 = vmul.f32 %v1537, %v2632
      %v2634 = vrcp.pop %v2560
      %v2635 = vmul.f32 %v1586, %v2634
      %v2636 = vrcp.pop %v2561
      %v2637 = vmul.f32 %v1635, %v2636
      %v2638 = vrcp.pop %v2562
      %v2639 = vmul.f32 %v1684, %v2638
      %v2640 = vrcp.pop %v2563
      %v2641 = vmul.f32 %v1733, %v2640
      %v2642 = vrcp.pop %v2545
      %v2643 = vmul.f32 %v1782, %v2642
      %v2644 = vrcp.pop %v2564
      %v2645 = vmul.f32 %v1831, %v2644
      %v2646 = vrcp.pop %v2565
      %v2647 = vmul.f32 %v1880, %v2646
      %v2648 = vrcp.pop %v2566
      %v2649 = vmul.f32 %v1929, %v2648
      %v2650 = vrcp.pop %v2567
      %v2651 = vmul.f32 %v1978, %v2650
      %v2652 = vrcp.pop %v2568
      %v2653 = vmul.f32 %v2027, %v2652
      %v2654 = vrcp.pop %v2569
      %v2655 = vmul.f32 %v2076, %v2654
      %v2656 = vrcp.pop %v2570
      %v2657 = vmul.f32 %v2125, %v2656
      %v2658 = vrcp.pop %v2549
      %v2659 = vmul.f32 %v2174, %v2658
      %v2660 = vrcp.pop %v2571
      %v2661 = vmul.f32 %v2223, %v2660
      %v2662 = vrcp.pop %v2572
      %v2663 = vmul.f32 %v2272, %v2662
      %v2664 = vrcp.pop %v2573
      %v2665 = vmul.f32 %v2321, %v2664
      %v2666 = vrcp.pop %v2574
      %v2667 = vmul.f32 %v2370, %v2666
      %v2668 = vrcp.pop %v2575
      %v2669 = vmul.f32 %v2419, %v2668
      %v2670 = vrcp.pop %v2576
      %v2671 = vmul.f32 %v2468, %v2670
      %v2672 = vrcp.pop %v2577
      %v2673 = vmul.f32 %v2517, %v2672
      %v2674 = vpack.c.bf16 %v2611, %v2611
      %v2675 = vpack.c.bf16 %v2613, %v2613
      %v2676 = vpack.c.bf16 %v2615, %v2615
      %v2677 = vpack.c.bf16 %v2617, %v2617
      %v2678 = vpack.c.bf16 %v2619, %v2619
      %v2679 = vpack.c.bf16 %v2621, %v2621
      %v2680 = vpack.c.bf16 %v2623, %v2623
      %v2681 = vpack.c.bf16 %v2625, %v2625
      %v2682 = vpack.c.bf16 %v2627, %v2627
      %v2683 = vpack.c.bf16 %v2629, %v2629
      %v2684 = vpack.c.bf16 %v2631, %v2631
      %v2685 = vpack.c.bf16 %v2633, %v2633
      %v2686 = vpack.c.bf16 %v2635, %v2635
      %v2687 = vpack.c.bf16 %v2637, %v2637
      %v2688 = vpack.c.bf16 %v2639, %v2639
      %v2689 = vpack.c.bf16 %v2641, %v2641
      %v2690 = vpack.c.bf16 %v2643, %v2643
      %v2691 = vpack.c.bf16 %v2645, %v2645
      %v2692 = vpack.c.bf16 %v2647, %v2647
      %v2693 = vpack.c.bf16 %v2649, %v2649
      %v2694 = vpack.c.bf16 %v2651, %v2651
      %v2695 = vpack.c.bf16 %v2653, %v2653
      %v2696 = vpack.c.bf16 %v2655, %v2655
      %v2697 = vpack.c.bf16 %v2657, %v2657
      %v2698 = vpack.c.bf16 %v2659, %v2659
      %v2699 = vpack.c.bf16 %v2661, %v2661
      %v2700 = vpack.c.bf16 %v2663, %v2663
      %v2701 = vpack.c.bf16 %v2665, %v2665
      %v2702 = vpack.c.bf16 %v2667, %v2667
      %v2703 = vpack.c.bf16 %v2669, %v2669
      %v2704 = vpack.c.bf16 %v2671, %v2671
      %v2705 = vpack.c.bf16 %v2673, %v2673
      %v2706 = vld [vmem:[%s2] sm:$0xf]
      %v2707 = vld [vmem:[%s2 + $0x4] sm:$0xf]
      %v2708 = vld [vmem:[%s2 + $0x8] sm:$0xf]
      %v2709 = vld [vmem:[%s2 + $0xc] sm:$0xf]
      %v2710 = vld [vmem:[%s2 + $0x10] sm:$0xf]
      %v2711 = vld [vmem:[%s2 + $0x14] sm:$0xf]
      %v2712 = vld [vmem:[%s2 + $0x18] sm:$0xf]
      %v2713 = vld [vmem:[%s2 + $0x1c] sm:$0xf]
      %v2714 = vld [vmem:[%s2 + $0x20] sm:$0xf]
      %v2715 = vld [vmem:[%s2 + $0x24] sm:$0xf]
      %v2716 = vld [vmem:[%s2 + $0x28] sm:$0xf]
      %v2717 = vld [vmem:[%s2 + $0x2c] sm:$0xf]
      %v2718 = vld [vmem:[%s2 + $0x30] sm:$0xf]
      %v2719 = vld [vmem:[%s2 + $0x34] sm:$0xf]
      %v2720 = vld [vmem:[%s2 + $0x38] sm:$0xf]
      %v2721 = vld [vmem:[%s2 + $0x3c] sm:$0xf]
      %v2722 = vld [vmem:[%s3] sm:$0x1]
      %v2724 = vlaneseq
      %v2725 = vshrl.u32 %v2724, 7
      %v2726 = vsub.s32 0, %v2725
      %v2727 = vrot.slane %v2722, %v2726
      %v2761 = vunpack.c.l.b16 %v2674
      %v2762 = vunpack.c.l.b16 %v2675
      %v2763 = vunpack.c.l.b16 %v2676
      %v2764 = vunpack.c.l.b16 %v2677
      %v2765 = vunpack.c.l.b16 %v2678
      %v2766 = vunpack.c.l.b16 %v2679
      %v2767 = vunpack.c.l.b16 %v2680
      %v2768 = vunpack.c.l.b16 %v2681
      %v2769 = vunpack.c.l.b16 %v2682
      %v2770 = vunpack.c.l.b16 %v2683
      %v2771 = vunpack.c.l.b16 %v2684
      %v2772 = vunpack.c.l.b16 %v2685
      %v2773 = vunpack.c.l.b16 %v2686
      %v2774 = vunpack.c.l.b16 %v2687
      %v2775 = vunpack.c.l.b16 %v2688
      %v2776 = vunpack.c.l.b16 %v2689
      %v2777 = vunpack.c.l.b16 %v2690
      %v2778 = vunpack.c.l.b16 %v2691
      %v2779 = vunpack.c.l.b16 %v2692
      %v2780 = vunpack.c.l.b16 %v2693
      %v2781 = vunpack.c.l.b16 %v2694
      %v2782 = vunpack.c.l.b16 %v2695
      %v2783 = vunpack.c.l.b16 %v2696
      %v2784 = vunpack.c.l.b16 %v2697
      %v2785 = vunpack.c.l.b16 %v2698
      %v2786 = vunpack.c.l.b16 %v2699
      %v2787 = vunpack.c.l.b16 %v2700
      %v2788 = vunpack.c.l.b16 %v2701
      %v2789 = vunpack.c.l.b16 %v2702
      %v2790 = vunpack.c.l.b16 %v2703
      %v2791 = vunpack.c.l.b16 %v2704
      %v2792 = vunpack.c.l.b16 %v2705
      %v2793 = vrot.slane %v2762, 7
      %vm2794 = vcmask 1041409
      %v2795 = vsel %vm2794, %v2793, %v2761
      %v2796 = vrot.slane %v2763, 6
      %vm2797 = vcmask 1042434
      %v2798 = vsel %vm2797, %v2796, %v2795
      %v2799 = vrot.slane %v2764, 5
      %vm2800 = vcmask 1043459
      %v2801 = vsel %vm2800, %v2799, %v2798
      %v2802 = vrot.slane %v2765, 4
      %vm2803 = vcmask 1044484
      %v2804 = vsel %vm2803, %v2802, %v2801
      %v2805 = vrot.slane %v2766, 3
      %vm2806 = vcmask 1045509
      %v2807 = vsel %vm2806, %v2805, %v2804
      %v2808 = vrot.slane %v2767, 2
      %vm2809 = vcmask 1046534
      %v2810 = vsel %vm2809, %v2808, %v2807
      %v2811 = vrot.slane %v2768, 1
      %vm2812 = vcmask 1047559
      %v2813 = vsel %vm2812, %v2811, %v2810
      %v2814 = vrot.slane %v2770, 7
      %v2815 = vsel %vm2794, %v2814, %v2769
      %v2816 = vrot.slane %v2771, 6
      %v2817 = vsel %vm2797, %v2816, %v2815
      %v2818 = vrot.slane %v2772, 5
      %v2819 = vsel %vm2800, %v2818, %v2817
      %v2820 = vrot.slane %v2773, 4
      %v2821 = vsel %vm2803, %v2820, %v2819
      %v2822 = vrot.slane %v2774, 3
      %v2823 = vsel %vm2806, %v2822, %v2821
      %v2824 = vrot.slane %v2775, 2
      %v2825 = vsel %vm2809, %v2824, %v2823
      %v2826 = vrot.slane %v2776, 1
      %v2827 = vsel %vm2812, %v2826, %v2825
      %v2828 = vrot.slane %v2778, 7
      %v2829 = vsel %vm2794, %v2828, %v2777
      %v2830 = vrot.slane %v2779, 6
      %v2831 = vsel %vm2797, %v2830, %v2829
      %v2832 = vrot.slane %v2780, 5
      %v2833 = vsel %vm2800, %v2832, %v2831
      %v2834 = vrot.slane %v2781, 4
      %v2835 = vsel %vm2803, %v2834, %v2833
      %v2836 = vrot.slane %v2782, 3
      %v2837 = vsel %vm2806, %v2836, %v2835
      %v2838 = vrot.slane %v2783, 2
      %v2839 = vsel %vm2809, %v2838, %v2837
      %v2840 = vrot.slane %v2784, 1
      %v2841 = vsel %vm2812, %v2840, %v2839
      %v2842 = vrot.slane %v2786, 7
      %v2843 = vsel %vm2794, %v2842, %v2785
      %v2844 = vrot.slane %v2787, 6
      %v2845 = vsel %vm2797, %v2844, %v2843
      %v2846 = vrot.slane %v2788, 5
      %v2847 = vsel %vm2800, %v2846, %v2845
      %v2848 = vrot.slane %v2789, 4
      %v2849 = vsel %vm2803, %v2848, %v2847
      %v2850 = vrot.slane %v2790, 3
      %v2851 = vsel %vm2806, %v2850, %v2849
      %v2852 = vrot.slane %v2791, 2
      %v2853 = vsel %vm2809, %v2852, %v2851
      %v2854 = vrot.slane %v2792, 1
      %v2855 = vsel %vm2812, %v2854, %v2853
      %v2856 = vpack.c.b16 %v2827, %v2813
      %v2857 = vpack.c.b16 %v2855, %v2841
      %v2876 = vunpack.c.l.b16 %v2706
      %v2877 = vunpack.c.l.b16 %v2707
      %v2878 = vunpack.c.l.b16 %v2708
      %v2879 = vunpack.c.l.b16 %v2709
      %v2880 = vunpack.c.l.b16 %v2710
      %v2881 = vunpack.c.l.b16 %v2711
      %v2882 = vunpack.c.l.b16 %v2712
      %v2883 = vunpack.c.l.b16 %v2713
      %v2884 = vunpack.c.l.b16 %v2714
      %v2885 = vunpack.c.l.b16 %v2715
      %v2886 = vunpack.c.l.b16 %v2716
      %v2887 = vunpack.c.l.b16 %v2717
      %v2888 = vunpack.c.l.b16 %v2718
      %v2889 = vunpack.c.l.b16 %v2719
      %v2890 = vunpack.c.l.b16 %v2720
      %v2891 = vunpack.c.l.b16 %v2721
      %v2892 = vpack.c.b16 %v2877, %v2876
      %v2893 = vpack.c.b16 %v2879, %v2878
      %v2894 = vpack.c.b16 %v2881, %v2880
      %v2895 = vpack.c.b16 %v2883, %v2882
      %v2896 = vpack.c.b16 %v2885, %v2884
      %v2897 = vpack.c.b16 %v2887, %v2886
      %v2898 = vpack.c.b16 %v2889, %v2888
      %v2899 = vpack.c.b16 %v2891, %v2890
      %2908 = vmatprep.subr.bf16.mxu0 0
      %2909 = vmatpush1.bf16.msra.mxu0 %v2892
      %2910 = vmatprep.subr.bf16.mxu0 0
      %2911 = vmatpush1.bf16.msra.mxu0 %v2893
      %2912 = vmatprep.subr.bf16.mxu0 0
      %2913 = vmatpush1.bf16.msra.mxu0 %v2894
      %2914 = vmatprep.subr.bf16.mxu0 0
      %2915 = vmatpush1.bf16.msra.mxu0 %v2895
      %2916 = vmatprep.subr.bf16.mxu0 0
      %2917 = vmatpush1.bf16.msra.mxu0 %v2896
      %2918 = vmatprep.subr.bf16.mxu0 0
      %2919 = vmatpush1.bf16.msra.mxu0 %v2897
      %2920 = vmatprep.subr.bf16.mxu0 0
      %2921 = vmatpush1.bf16.msra.mxu0 %v2898
      %2922 = vmatprep.subr.bf16.mxu0 0
      %2923 = vmatpush1.bf16.msra.mxu0 %v2899
      %2924 = vmatprep.subr.bf16.mxu0 0
      %2925 = vmatpush1.bf16.msra.mxu0 0
      %2926 = vmatprep.subr.bf16.mxu0 0
      %2927 = vmatpush1.bf16.msra.mxu0 0
      %2928 = vmatprep.subr.bf16.mxu0 0
      %2929 = vmatpush1.bf16.msra.mxu0 0
      %2930 = vmatprep.subr.bf16.mxu0 0
      %2931 = vmatpush1.bf16.msra.mxu0 0
      %2932 = vmatprep.subr.bf16.mxu0 0
      %2933 = vmatpush1.bf16.msra.mxu0 0
      %2934 = vmatprep.subr.bf16.mxu0 0
      %2935 = vmatpush1.bf16.msra.mxu0 0
      %2936 = vmatprep.subr.bf16.mxu0 0
      %2937 = vmatpush1.bf16.msra.mxu0 0
      %2938 = vmatprep.subr.bf16.mxu0 0
      %2939 = vmatpush1.bf16.msra.mxu0 0
      %2940 = vmatprep.mubr.bf16.mxu0 0
      %2941 = vmatmul.mubr.bf16.gmra.mrb[0].mxu0 %v2856
      %v2942 = vpop.f32.mrb[0].mxu0
      %v2943 = vadd.f32 %v2727, %v2942
      %v2944 = vpop.f32.mrb[0].mxu0
      %v2945 = vpop.f32.mrb[0].mxu0
      %v2946 = vadd.f32 %v2727, %v2945
      %v2947 = vpop.f32.mrb[0].mxu0
      %2948 = vmatprep.mubr.bf16.mxu0 0
      %2949 = vmatmul.mubr.bf16.gmra.mrb[0].mxu0 %v2857
      %v2950 = vpop.f32.mrb[0].mxu0
      %v2951 = vadd.f32 %v2727, %v2950
      %v2952 = vpop.f32.mrb[0].mxu0
      %v2953 = vpop.f32.mrb[0].mxu0
      %v2954 = vadd.f32 %v2727, %v2953
      %v2955 = vpop.f32.mrb[0].mxu0
      %2956 = vdwg.mxu0
      %v2957 = vtanh.pop %v2943
      %v2958 = vtanh.pop %v2946
      %v2959 = vtanh.pop %v2951
      %v2960 = vtanh.pop %v2954
      %v2961 = vpack.c.bf16 %v2958, %v2957
      %v2962 = vpack.c.bf16 %v2960, %v2959
      %v2963 = vld [vmem:[%s4] sm:$0xf]
      %v2964 = vld [vmem:[%s4 + $0x4] sm:$0xf]
      %v2965 = vld [vmem:[%s4 + $0x8] sm:$0xf]
      %v2966 = vld [vmem:[%s4 + $0xc] sm:$0xf]
      %v2967 = vld [vmem:[%s4 + $0x10] sm:$0xf]
      %v2968 = vld [vmem:[%s4 + $0x14] sm:$0xf]
      %v2969 = vld [vmem:[%s4 + $0x18] sm:$0xf]
      %v2970 = vld [vmem:[%s4 + $0x1c] sm:$0xf]
      %v2971 = vld [vmem:[%s4 + $0x20] sm:$0xf]
      %v2972 = vld [vmem:[%s4 + $0x24] sm:$0xf]
      %v2973 = vld [vmem:[%s4 + $0x28] sm:$0xf]
      %v2974 = vld [vmem:[%s4 + $0x2c] sm:$0xf]
      %v2975 = vld [vmem:[%s4 + $0x30] sm:$0xf]
      %v2976 = vld [vmem:[%s4 + $0x34] sm:$0xf]
      %v2977 = vld [vmem:[%s4 + $0x38] sm:$0xf]
      %v2978 = vld [vmem:[%s4 + $0x3c] sm:$0xf]
      %v2979 = vld [vmem:[%s5] sm:$0x1]
      %v2981 = vlaneseq
      %v2982 = vshrl.u32 %v2981, 7
      %v2983 = vsub.s32 0, %v2982
      %v2984 = vrot.slane %v2979, %v2983
      %v3002 = vunpack.c.l.b16 %v2963
      %v3003 = vunpack.c.l.b16 %v2964
      %v3004 = vunpack.c.l.b16 %v2965
      %v3005 = vunpack.c.l.b16 %v2966
      %v3006 = vunpack.c.l.b16 %v2967
      %v3007 = vunpack.c.l.b16 %v2968
      %v3008 = vunpack.c.l.b16 %v2969
      %v3009 = vunpack.c.l.b16 %v2970
      %v3010 = vunpack.c.l.b16 %v2971
      %v3011 = vunpack.c.l.b16 %v2972
      %v3012 = vunpack.c.l.b16 %v2973
      %v3013 = vunpack.c.l.b16 %v2974
      %v3014 = vunpack.c.l.b16 %v2975
      %v3015 = vunpack.c.l.b16 %v2976
      %v3016 = vunpack.c.l.b16 %v2977
      %v3017 = vunpack.c.l.b16 %v2978
      %v3018 = vpack.c.b16 %v3003, %v3002
      %v3019 = vpack.c.b16 %v3005, %v3004
      %v3020 = vpack.c.b16 %v3007, %v3006
      %v3021 = vpack.c.b16 %v3009, %v3008
      %v3022 = vpack.c.b16 %v3011, %v3010
      %v3023 = vpack.c.b16 %v3013, %v3012
      %v3024 = vpack.c.b16 %v3015, %v3014
      %v3025 = vpack.c.b16 %v3017, %v3016
      %3034 = vmatprep.subr.bf16.mxu0 0
      %3035 = vmatpush1.bf16.msra.mxu0 %v3018
      %3036 = vmatprep.subr.bf16.mxu0 0
      %3037 = vmatpush1.bf16.msra.mxu0 %v3019
      %3038 = vmatprep.subr.bf16.mxu0 0
      %3039 = vmatpush1.bf16.msra.mxu0 %v3020
      %3040 = vmatprep.subr.bf16.mxu0 0
      %3041 = vmatpush1.bf16.msra.mxu0 %v3021
      %3042 = vmatprep.subr.bf16.mxu0 0
      %3043 = vmatpush1.bf16.msra.mxu0 %v3022
      %3044 = vmatprep.subr.bf16.mxu0 0
      %3045 = vmatpush1.bf16.msra.mxu0 %v3023
      %3046 = vmatprep.subr.bf16.mxu0 0
      %3047 = vmatpush1.bf16.msra.mxu0 %v3024
      %3048 = vmatprep.subr.bf16.mxu0 0
      %3049 = vmatpush1.bf16.msra.mxu0 %v3025
      %3050 = vmatprep.subr.bf16.mxu0 0
      %3051 = vmatpush1.bf16.msra.mxu0 0
      %3052 = vmatprep.subr.bf16.mxu0 0
      %3053 = vmatpush1.bf16.msra.mxu0 0
      %3054 = vmatprep.subr.bf16.mxu0 0
      %3055 = vmatpush1.bf16.msra.mxu0 0
      %3056 = vmatprep.subr.bf16.mxu0 0
      %3057 = vmatpush1.bf16.msra.mxu0 0
      %3058 = vmatprep.subr.bf16.mxu0 0
      %3059 = vmatpush1.bf16.msra.mxu0 0
      %3060 = vmatprep.subr.bf16.mxu0 0
      %3061 = vmatpush1.bf16.msra.mxu0 0
      %3062 = vmatprep.subr.bf16.mxu0 0
      %3063 = vmatpush1.bf16.msra.mxu0 0
      %3064 = vmatprep.subr.bf16.mxu0 0
      %3065 = vmatpush1.bf16.msra.mxu0 0
      %3066 = vmatprep.mubr.bf16.mxu0 0
      %3067 = vmatmul.mubr.bf16.gmra.mrb[0].mxu0 %v2961
      %v3068 = vpop.f32.mrb[0].mxu0
      %v3069 = vadd.f32 %v2984, %v3068
      %v3070 = vpop.f32.mrb[0].mxu0
      %v3071 = vpop.f32.mrb[0].mxu0
      %v3072 = vadd.f32 %v2984, %v3071
      %v3073 = vpop.f32.mrb[0].mxu0
      %3074 = vmatprep.mubr.bf16.mxu0 0
      %3075 = vmatmul.mubr.bf16.gmra.mrb[0].mxu0 %v2962
      %v3076 = vpop.f32.mrb[0].mxu0
      %v3077 = vadd.f32 %v2984, %v3076
      %v3078 = vpop.f32.mrb[0].mxu0
      %v3079 = vpop.f32.mrb[0].mxu0
      %v3080 = vadd.f32 %v2984, %v3079
      %v3081 = vpop.f32.mrb[0].mxu0
      %3082 = vdwg.mxu0
      %v3083 = vmax.f32 %v3069, 0.0
      %v3084 = vmax.f32 %v3072, 0.0
      %v3085 = vmax.f32 %v3077, 0.0
      %v3086 = vmax.f32 %v3080, 0.0
      %v3087 = vpack.c.bf16 %v3084, %v3083
      %v3088 = vpack.c.bf16 %v3086, %v3085
      %v3089 = vld [vmem:[%s6] sm:$0xf]
      %v3090 = vld [vmem:[%s6 + $0x4] sm:$0xf]
      %v3091 = vld [vmem:[%s6 + $0x8] sm:$0xf]
      %v3092 = vld [vmem:[%s6 + $0xc] sm:$0xf]
      %v3093 = vld [vmem:[%s6 + $0x10] sm:$0xf]
      %v3094 = vld [vmem:[%s6 + $0x14] sm:$0xf]
      %v3095 = vld [vmem:[%s6 + $0x18] sm:$0xf]
      %v3096 = vld [vmem:[%s6 + $0x1c] sm:$0xf]
      %v3097 = vld [vmem:[%s6 + $0x20] sm:$0xf]
      %v3098 = vld [vmem:[%s6 + $0x24] sm:$0xf]
      %v3099 = vld [vmem:[%s6 + $0x28] sm:$0xf]
      %v3100 = vld [vmem:[%s6 + $0x2c] sm:$0xf]
      %v3101 = vld [vmem:[%s6 + $0x30] sm:$0xf]
      %v3102 = vld [vmem:[%s6 + $0x34] sm:$0xf]
      %v3103 = vld [vmem:[%s6 + $0x38] sm:$0xf]
      %v3104 = vld [vmem:[%s6 + $0x3c] sm:$0xf]
      %v3105 = vld [vmem:[%s7] sm:$0x1]
      %v3107 = vlaneseq
      %v3108 = vshrl.u32 %v3107, 7
      %v3109 = vsub.s32 0, %v3108
      %v3110 = vrot.slane %v3105, %v3109
      %v3128 = vunpack.c.l.b16 %v3089
      %v3129 = vunpack.c.l.b16 %v3090
      %v3130 = vunpack.c.l.b16 %v3091
      %v3131 = vunpack.c.l.b16 %v3092
      %v3132 = vunpack.c.l.b16 %v3093
      %v3133 = vunpack.c.l.b16 %v3094
      %v3134 = vunpack.c.l.b16 %v3095
      %v3135 = vunpack.c.l.b16 %v3096
      %v3136 = vunpack.c.l.b16 %v3097
      %v3137 = vunpack.c.l.b16 %v3098
      %v3138 = vunpack.c.l.b16 %v3099
      %v3139 = vunpack.c.l.b16 %v3100
      %v3140 = vunpack.c.l.b16 %v3101
      %v3141 = vunpack.c.l.b16 %v3102
      %v3142 = vunpack.c.l.b16 %v3103
      %v3143 = vunpack.c.l.b16 %v3104
      %v3144 = vpack.c.b16 %v3129, %v3128
      %v3145 = vpack.c.b16 %v3131, %v3130
      %v3146 = vpack.c.b16 %v3133, %v3132
      %v3147 = vpack.c.b16 %v3135, %v3134
      %v3148 = vpack.c.b16 %v3137, %v3136
      %v3149 = vpack.c.b16 %v3139, %v3138
      %v3150 = vpack.c.b16 %v3141, %v3140
      %v3151 = vpack.c.b16 %v3143, %v3142
      %3160 = vmatprep.subr.bf16.mxu0 0
      %3161 = vmatpush1.bf16.msra.mxu0 %v3144
      %3162 = vmatprep.subr.bf16.mxu0 0
      %3163 = vmatpush1.bf16.msra.mxu0 %v3145
      %3164 = vmatprep.subr.bf16.mxu0 0
      %3165 = vmatpush1.bf16.msra.mxu0 %v3146
      %3166 = vmatprep.subr.bf16.mxu0 0
      %3167 = vmatpush1.bf16.msra.mxu0 %v3147
      %3168 = vmatprep.subr.bf16.mxu0 0
      %3169 = vmatpush1.bf16.msra.mxu0 %v3148
      %3170 = vmatprep.subr.bf16.mxu0 0
      %3171 = vmatpush1.bf16.msra.mxu0 %v3149
      %3172 = vmatprep.subr.bf16.mxu0 0
      %3173 = vmatpush1.bf16.msra.mxu0 %v3150
      %3174 = vmatprep.subr.bf16.mxu0 0
      %3175 = vmatpush1.bf16.msra.mxu0 %v3151
      %3176 = vmatprep.subr.bf16.mxu0 0
      %3177 = vmatpush1.bf16.msra.mxu0 0
      %3178 = vmatprep.subr.bf16.mxu0 0
      %3179 = vmatpush1.bf16.msra.mxu0 0
      %3180 = vmatprep.subr.bf16.mxu0 0
      %3181 = vmatpush1.bf16.msra.mxu0 0
      %3182 = vmatprep.subr.bf16.mxu0 0
      %3183 = vmatpush1.bf16.msra.mxu0 0
      %3184 = vmatprep.subr.bf16.mxu0 0
      %3185 = vmatpush1.bf16.msra.mxu0 0
      %3186 = vmatprep.subr.bf16.mxu0 0
      %3187 = vmatpush1.bf16.msra.mxu0 0
      %3188 = vmatprep.subr.bf16.mxu0 0
      %3189 = vmatpush1.bf16.msra.mxu0 0
      %3190 = vmatprep.subr.bf16.mxu0 0
      %3191 = vmatpush1.bf16.msra.mxu0 0
      %3192 = vmatprep.mubr.bf16.mxu0 0
      %3193 = vmatmul.mubr.bf16.gmra.mrb[0].mxu0 %v3087
      %v3194 = vpop.f32.mrb[0].mxu0
      %v3195 = vadd.f32 %v3110, %v3194
      %v3196 = vpop.f32.mrb[0].mxu0
      %v3197 = vpop.f32.mrb[0].mxu0
      %v3198 = vadd.f32 %v3110, %v3197
      %v3199 = vpop.f32.mrb[0].mxu0
      %3200 = vmatprep.mubr.bf16.mxu0 0
      %3201 = vmatmul.mubr.bf16.gmra.mrb[0].mxu0 %v3088
      %v3202 = vpop.f32.mrb[0].mxu0
      %v3203 = vadd.f32 %v3110, %v3202
      %v3204 = vpop.f32.mrb[0].mxu0
      %v3205 = vpop.f32.mrb[0].mxu0
      %v3206 = vadd.f32 %v3110, %v3205
      %v3207 = vpop.f32.mrb[0].mxu0
      %3208 = vdwg.mxu0
      %3209 = vst [vmem:[%s332] sm:$0xff] %v3195
      %3210 = vst [vmem:[%s332 + $0x8] sm:$0xff] %v3198
      %3211 = vst [vmem:[%s332 + $0x10] sm:$0xff] %v3203
      %3212 = vst [vmem:[%s332 + $0x18] sm:$0xff] %v3206
      %s3213 = smul.u32 4, %s19
      %p3214 = scmp.lt.s32.totalorder %s3213, 7
      %s3215 = scalar_select %p3214, %s3213, 7
      %s3216 = smul.addr %s3215, 8
      %s3217 = scalar_lea.vmem %s8, %s3216
      // Predicated region
      $region53: #{fake_news_classifier_forward.1} parent=51 // pred_check
        %p3218 = pneg %p215
      $region54: #{fake_news_classifier_forward.1} parent=51 // pred_check_branch
        %3220 = sbr.rel (%p3218) target = $region56
      $region55: #{fake_news_classifier_forward.1} parent=51 // pred_region
        %s3221 = smul.u32 4, %s19
      $region56: #{fake_news_classifier_forward.1} parent=51 // pred_fallthru
        _
    $region52: #{fake_news_classifier_forward.1} parent=5 // pred_fallthru
      _
    %p3222 = scmp.le.s32.totalorder 2, %s14
    // Predicated region
    $region57: #{fake_news_classifier_forward.1} parent=5 // pred_check
      %p3223 = pneg %p3222
    $region58: #{fake_news_classifier_forward.1} parent=5 // pred_check_branch
      %3225 = sbr.rel (%p3223) target = $region60
    $region59: #{fake_news_classifier_forward.1} parent=5 // pred_region
      %s3226 = ssub.s32 %s14, 2
      // Predicated region
      $region61: #{fake_news_classifier_forward.1} parent=59 // pred_check
        %p3227 = pneg %p221
      $region62: #{fake_news_classifier_forward.1} parent=59 // pred_check_branch
        %3229 = sbr.rel (%p3227) target = $region64
      $region63: #{fake_news_classifier_forward.1} parent=59 // pred_region
        %s3230 = smul.u32 4, %s20
        %p3231 = scmp.lt.s32.totalorder %s3230, 7
        %s3232 = scalar_select %p3231, %s3230, 7
        %s3233 = smul.addr %s3232, 8
        %s3234 = scalar_lea.vmem %s8, %s3233
      $region64: #{fake_news_classifier_forward.1} parent=59 // pred_fallthru
        _
    $region60: #{fake_news_classifier_forward.1} parent=5 // pred_fallthru
      _
  $region6: #{fake_news_classifier_forward.1} parent=0 // loop_footer
    %s18 = sadd.s32 1, %s14
  $region7: #{fake_news_classifier_forward.1} parent=0 // loop_footer_branch
    %13 = sbr.rel target = $region3
  $region8: #{fake_news_classifier_forward.1} parent=0 // loop_exit
    _

</llo_original>
